<compile_context>
chip_gen: v7x
topology: tpu7x:2x2x1
jax: 0.10.0
libtpu: 0.0.40
codegen_flags: <defaults>
</compile_context>

<pallas_src>
import functools
import math

import jax
import jax.numpy as jnp
from jax.experimental import pallas as pl
from jax.experimental.pallas import tpu as pltpu


def _layernorm(h, gamma, beta, eps=1e-5):
    mu = jnp.mean(h, axis=-1, keepdims=True)
    var = jnp.mean((h - mu) ** 2, axis=-1, keepdims=True)
    return (h - mu) * jax.lax.rsqrt(var + eps) * gamma + beta


def encoder_kernel(
    x_hbm,                                  # (B*S, D) f32, raw HBM ref
    wqkv_ref, bqkv_ref, wo_ref, bo_ref,
    w1_ref, b1_ref, w2_ref, b2_ref,
    g1_ref, be1_ref, g2_ref, be2_ref,
    out_ref, attn_ref,
    h_ref, ctx_ref, dma_sem,                # VMEM scratches + DMA semaphore
    *, nhead, batch_tile, seq,
):
    bidx = pl.program_id(0)                 # batch block  ("parallel")
    layer = pl.program_id(1)                # layer        ("arbitrary")
    tb, S = batch_tile, seq
    R = tb * S                              # rows resident in this block
    D = h_ref.shape[-1]
    hd = D // nhead
    scale = 1.0 / (hd ** 0.5)
    inv_h = 1.0 / nhead

    # ---- layer 0: DMA this batch block's activation from HBM into VMEM ----
    @pl.when(layer == 0)
    def _():
        start = pl.multiple_of(bidx * R, R)
        cp = pltpu.make_async_copy(x_hbm.at[pl.ds(start, R)], h_ref, dma_sem)
        cp.start()
        cp.wait()

    x = h_ref[...]                          # (R, D) f32, resident activation
    xb = x.astype(jnp.bfloat16)

    # ---- fused QKV projection: one (R,D) x (D,3D) MXU matmul ---------------
    qkv = jnp.dot(xb, wqkv_ref[0], preferred_element_type=jnp.float32) + bqkv_ref[0]
    q = qkv[:, :D]
    k = qkv[:, D:2 * D]
    v = qkv[:, 2 * D:]

    # ---- multi-head self-attention (static head loop, nhead is small) ------
    # NOTE: for production configs keep hd a multiple of 128 (or pre-permute
    # wqkv) so the per-head column slices below stay lane-tile aligned.
    for h in range(nhead):
        sl = slice(h * hd, (h + 1) * hd)
        qh = q[:, sl].reshape(tb, S, hd).astype(jnp.bfloat16)
        kh = k[:, sl].reshape(tb, S, hd).astype(jnp.bfloat16)
        vh = v[:, sl].reshape(tb, S, hd).astype(jnp.bfloat16)
        # contraction on the last dim of both operands: no explicit K transpose
        s = jnp.einsum("bqd,bkd->bqk", qh, kh,
                       preferred_element_type=jnp.float32) * scale
        s = s - jnp.max(s, axis=-1, keepdims=True)
        p = jnp.exp(s)
        # exact normalization: the attention map returned by the Encoder must
        # have rows that sum to 1 (no approx reciprocal on this path).
        p = p / jnp.sum(p, axis=-1, keepdims=True)

        # head-averaged attention map is only needed from layer 0: accumulate
        # it directly into the output block (no live accumulator at layer>0).
        @pl.when(layer == 0)
        def _(p=p, h=h):
            if h == 0:
                attn_ref[...] = p * inv_h
            else:
                attn_ref[...] = attn_ref[...] + p * inv_h

        ctx_h = jnp.einsum("bqk,bkd->bqd", p.astype(jnp.bfloat16), vh,
                           preferred_element_type=jnp.float32)
        # write per-head context into the VMEM scratch (no concatenate)
        ctx_ref[:, sl] = ctx_h.reshape(R, hd)

    attn_out = jnp.dot(ctx_ref[...].astype(jnp.bfloat16), wo_ref[0],
                       preferred_element_type=jnp.float32) + bo_ref[0]

    # residual + LayerNorm 1 (dropout == identity in eval)
    h1 = _layernorm(x + attn_out, g1_ref[0], be1_ref[0])

    # ---- feed-forward -------------------------------------------------------
    ff = jnp.dot(h1.astype(jnp.bfloat16), w1_ref[0],
                 preferred_element_type=jnp.float32) + b1_ref[0]
    ff = jnp.maximum(ff, 0.0)               # ReLU
    ff = jnp.dot(ff.astype(jnp.bfloat16), w2_ref[0],
                 preferred_element_type=jnp.float32) + b2_ref[0]

    # residual + LayerNorm 2
    h2 = _layernorm(h1 + ff, g2_ref[0], be2_ref[0])

    h_ref[...] = h2                         # stays resident for the next layer

    @pl.when(layer == pl.num_programs(1) - 1)
    def _():
        out_ref[...] = h2


PARAM_ORDER = ("wqkv", "bqkv", "wo", "bo", "w1", "b1", "w2", "b2",
               "g1", "be1", "g2", "be2")


def _vmem_limit_bytes(plist, tb, S, D, dff):
    """Explicit scoped-VMEM budget (review item): double-buffered per-layer
    weight slabs + resident scratches + output blocks + f32 temporaries."""
    per_layer_w = sum(math.prod(p.shape[1:]) * p.dtype.itemsize for p in plist)
    rows = tb * S
    scratches = 2 * rows * D * 4                       # h_ref + ctx_ref (f32)
    outs = (rows * D + tb * S * S) * 4 * 2             # out + attn blocks
    temps = rows * (3 * D + dff + 2 * D) * 4 + 2 * tb * S * S * 4
    total = 2 * per_layer_w + scratches + outs + temps
    return int(min(1.5 * total + (8 << 20), 100 << 20))


def encoder_forward(x, stacked, nhead, batch_tile=None):
    """Encoder.forward: all layers fused into a single pallas_call."""
    B, S, D = x.shape
    L = stacked["wqkv"].shape[0]
    dff = stacked["w1"].shape[-1]
    tb = batch_tile if batch_tile is not None else B
    assert B % tb == 0, "batch_tile must divide batch"
    nb = B // tb
    plist = [stacked[n] for n in PARAM_ORDER]

    def weight_spec(p):
        nd = p.ndim
        return pl.BlockSpec((1,) + p.shape[1:],
                            lambda b, l, _nd=nd: (l,) + (0,) * (_nd - 1))

    in_specs = [pl.BlockSpec(memory_space=pl.ANY)]      # x stays in HBM
    in_specs += [weight_spec(p) for p in plist]         # per-layer slabs

    grid_spec = pltpu.PrefetchScalarGridSpec(
        num_scalar_prefetch=0,
        grid=(nb, L),
        in_specs=in_specs,
        out_specs=(
            pl.BlockSpec((tb * S, D), lambda b, l: (b, 0)),    # per-batch-block out
            pl.BlockSpec((tb, S, S), lambda b, l: (b, 0, 0)),  # layer-0 attention
        ),
        scratch_shapes=[
            pltpu.VMEM((tb * S, D), jnp.float32),   # resident activation
            pltpu.VMEM((tb * S, D), jnp.float32),   # per-head context assembly
            pltpu.SemaphoreType.DMA(()),            # layer-0 input DMA
        ],
    )

    out2d, attn = pl.pallas_call(
        functools.partial(encoder_kernel, nhead=nhead, batch_tile=tb, seq=S),
        out_shape=(
            jax.ShapeDtypeStruct((B * S, D), jnp.float32),
            jax.ShapeDtypeStruct((B, S, S), jnp.float32),
        ),
        grid_spec=grid_spec,
        compiler_params=pltpu.CompilerParams(
            # batch blocks independent (-> both v7x TensorCores), layers serial
            dimension_semantics=("parallel", "arbitrary"),
            vmem_limit_bytes=_vmem_limit_bytes(plist, tb, S, D, dff),
        ),
    )(x.reshape(B * S, D), *plist)
    return out2d.reshape(B, S, D), attn


def init_stacked_params(key, num_layers, d_model, dim_ff):
    L = num_layers
    ks = jax.random.split(key, 12)
    std = 0.02

    def w(k, shape):
        return jax.random.normal(k, shape, jnp.float32) * std

    wq = w(ks[0], (L, d_model, d_model))
    wk = w(ks[1], (L, d_model, d_model))
    wv = w(ks[2], (L, d_model, d_model))
    return {
        # MXU matmul weights stored in bf16 (native MXU dtype, halves HBM/VMEM)
        "wqkv": jnp.concatenate([wq, wk, wv], axis=-1).astype(jnp.bfloat16),
        "wo": w(ks[3], (L, d_model, d_model)).astype(jnp.bfloat16),
        "w1": w(ks[4], (L, d_model, dim_ff)).astype(jnp.bfloat16),
        "w2": w(ks[5], (L, dim_ff, d_model)).astype(jnp.bfloat16),
        # biases / LayerNorm params kept in f32 (elementwise math stays f32)
        "bqkv": w(ks[6], (L, 1, 3 * d_model)),
        "bo": w(ks[7], (L, 1, d_model)),
        "b1": w(ks[8], (L, 1, dim_ff)),
        "b2": w(ks[9], (L, 1, d_model)),
        "g1": 1.0 + 0.1 * jax.random.normal(ks[10], (L, 1, d_model), jnp.float32),
        "be1": w(ks[11], (L, 1, d_model)),
        "g2": jnp.ones((L, 1, d_model), jnp.float32),
        "be2": jnp.zeros((L, 1, d_model), jnp.float32),
    }


def encoder_reference(x, stacked, nhead):
    """Pure-JAX reference (f32 math, same bf16 weight values)."""
    B, S, D = x.shape
    L = stacked["wqkv"].shape[0]
    hd = D // nhead
    h = x.reshape(B * S, D)
    attention = None
    for l in range(L):
        wqkv = stacked["wqkv"][l].astype(jnp.float32)
        wo = stacked["wo"][l].astype(jnp.float32)
        w1 = stacked["w1"][l].astype(jnp.float32)
        w2 = stacked["w2"][l].astype(jnp.float32)
        bqkv, bo = stacked["bqkv"][l], stacked["bo"][l]
        b1, b2 = stacked["b1"][l], stacked["b2"][l]
        g1, be1 = stacked["g1"][l], stacked["be1"][l]
        g2, be2 = stacked["g2"][l], stacked["be2"][l]

        qkv = h @ wqkv + bqkv
        q, k, v = qkv[:, :D], qkv[:, D:2 * D], qkv[:, 2 * D:]
        q4 = q.reshape(B, S, nhead, hd).transpose(0, 2, 1, 3)
        k4 = k.reshape(B, S, nhead, hd).transpose(0, 2, 1, 3)
        v4 = v.reshape(B, S, nhead, hd).transpose(0, 2, 1, 3)
        s = jnp.einsum("bhqd,bhkd->bhqk", q4, k4) / (hd ** 0.5)
        p = jax.nn.softmax(s, axis=-1)
        ctx = jnp.einsum("bhqk,bhkd->bhqd", p, v4)
        ctx = ctx.transpose(0, 2, 1, 3).reshape(B * S, D)
        attn_out = ctx @ wo + bo
        h1 = _layernorm(h + attn_out, g1, be1)
        ff = jnp.maximum(h1 @ w1 + b1, 0.0) @ w2 + b2
        h = _layernorm(h1 + ff, g2, be2)
        if l == 0:
            attention = jnp.mean(p, axis=1)
    return h.reshape(B, S, D), attention


if __name__ == "__main__":
    B, S, D = 2, 8, 128          # batch, seq, d_model (lane-dense last dims)
    NHEAD, DIM_FF = 4, 256
    NUM_LAYERS = 2

    root = jax.random.PRNGKey(0)
    kx, kp = jax.random.split(root)
    x = jax.random.normal(kx, (B, S, D), jnp.float32)
    params = init_stacked_params(kp, NUM_LAYERS, D, DIM_FF)

    out, attn = encoder_forward(x, params, NHEAD, batch_tile=1)
    out = jax.block_until_ready(out)
    attn = jax.block_until_ready(attn)

    assert out.shape == (B, S, D)
    assert attn.shape == (B, S, S)
    # rows of the (layer-0, head-averaged) attention must sum to 1 (exact softmax)
    assert jnp.allclose(jnp.sum(attn, axis=-1), 1.0, atol=1e-3)

    # compare against pure-JAX f32 reference (diff comes from bf16 MXU operands)
    ref_out, ref_attn = encoder_reference(x, params, NHEAD)
    assert jnp.allclose(attn, ref_attn, atol=2e-2), \
        float(jnp.max(jnp.abs(attn - ref_attn)))
    assert jnp.allclose(out, ref_out, atol=5e-2, rtol=5e-2), \
        float(jnp.max(jnp.abs(out - ref_out)))

    print("KERNEL_OK")
</pallas_src>

<mosaic_0001>
module attributes {stable_mosaic.version = 11 : i64} {
  func.func @encoder_kernel(%arg0: i32, %arg1: i32, %arg2: memref<16x128xf32, #tpu.memory_space<any>>, %arg3: memref<1x128x384xbf16, #tpu.memory_space<vmem>>, %arg4: memref<1x1x384xf32, #tpu.memory_space<vmem>>, %arg5: memref<1x128x128xbf16, #tpu.memory_space<vmem>>, %arg6: memref<1x1x128xf32, #tpu.memory_space<vmem>>, %arg7: memref<1x128x256xbf16, #tpu.memory_space<vmem>>, %arg8: memref<1x1x256xf32, #tpu.memory_space<vmem>>, %arg9: memref<1x256x128xbf16, #tpu.memory_space<vmem>>, %arg10: memref<1x1x128xf32, #tpu.memory_space<vmem>>, %arg11: memref<1x1x128xf32, #tpu.memory_space<vmem>>, %arg12: memref<1x1x128xf32, #tpu.memory_space<vmem>>, %arg13: memref<1x1x128xf32, #tpu.memory_space<vmem>>, %arg14: memref<1x1x128xf32, #tpu.memory_space<vmem>>, %arg15: memref<8x128xf32, #tpu.memory_space<vmem>>, %arg16: memref<1x8x8xf32, #tpu.memory_space<vmem>>, %arg17: memref<8x128xf32, #tpu.memory_space<vmem>>, %arg18: memref<8x128xf32, #tpu.memory_space<vmem>>, %arg19: memref<!tpu.dma_semaphore, #tpu.memory_space<semaphore_mem>>) attributes {dimension_semantics = [#tpu.dimension_semantics<parallel>, #tpu.dimension_semantics<arbitrary>], iteration_bounds = array<i64: 2, 2>, scalar_prefetch = 0 : i64, scratch_operands = 3 : i64, tpu.core_type = #tpu.core_type<tc>, window_params = [{}, {transform_indices = @transform_1, window_bounds = array<i64: 1, 128, 384>}, {transform_indices = @transform_2, window_bounds = array<i64: 1, 1, 384>}, {transform_indices = @transform_3, window_bounds = array<i64: 1, 128, 128>}, {transform_indices = @transform_4, window_bounds = array<i64: 1, 1, 128>}, {transform_indices = @transform_5, window_bounds = array<i64: 1, 128, 256>}, {transform_indices = @transform_6, window_bounds = array<i64: 1, 1, 256>}, {transform_indices = @transform_7, window_bounds = array<i64: 1, 256, 128>}, {transform_indices = @transform_8, window_bounds = array<i64: 1, 1, 128>}, {transform_indices = @transform_9, window_bounds = array<i64: 1, 1, 128>}, {transform_indices = @transform_10, window_bounds = array<i64: 1, 1, 128>}, {transform_indices = @transform_11, window_bounds = array<i64: 1, 1, 128>}, {transform_indices = @transform_12, window_bounds = array<i64: 1, 1, 128>}, {transform_indices = @transform_13, window_bounds = array<i64: 8, 128>}, {transform_indices = @transform_14, window_bounds = array<i64: 1, 8, 8>}]} {
    %c0_i32 = arith.constant 0 : i32
    %0 = arith.cmpi eq, %arg1, %c0_i32 : i32
    %1 = arith.extui %0 : i1 to i32
    %c0_i32_0 = arith.constant 0 : i32
    %2 = arith.cmpi ne, %1, %c0_i32_0 : i32
    scf.if %2 {
      %c8_i32 = arith.constant 8 : i32
      %212 = arith.muli %arg0, %c8_i32 : i32
      %213 = tpu.assume_multiple %212, 8 : i32
      %c0_i32_90 = arith.constant 0 : i32
      %214 = tpu.memref_slice %arg2[%213, %c0_i32_90] : memref<16x128xf32, #tpu.memory_space<any>> -> memref<8x128xf32, #tpu.memory_space<any>>
      tpu.enqueue_dma source(%214 : memref<8x128xf32, #tpu.memory_space<any>>) target(%arg17 : memref<8x128xf32, #tpu.memory_space<vmem>>) target_semaphore(%arg19 : memref<!tpu.dma_semaphore, #tpu.memory_space<semaphore_mem>>)
      %c0_i32_91 = arith.constant 0 : i32
      %215 = tpu.memref_slice %arg2[%213, %c0_i32_91] : memref<16x128xf32, #tpu.memory_space<any>> -> memref<8x128xf32, #tpu.memory_space<any>>
      tpu.wait_dma2 semaphore(%arg19 : memref<!tpu.dma_semaphore, #tpu.memory_space<semaphore_mem>>) src(%215 : memref<8x128xf32, #tpu.memory_space<any>>) dst(%arg17 : memref<8x128xf32, #tpu.memory_space<vmem>>)
    } else {
    }
    %c0 = arith.constant 0 : index
    %c0_1 = arith.constant 0 : index
    %3 = vector.load %arg17[%c0, %c0_1] : memref<8x128xf32, #tpu.memory_space<vmem>>, vector<8x128xf32>
    %4 = arith.truncf %3 : vector<8x128xf32> to vector<8x128xbf16>
    %c0_2 = arith.constant 0 : index
    %c0_3 = arith.constant 0 : index
    %c0_4 = arith.constant 0 : index
    %5 = vector.load %arg3[%c0_2, %c0_3, %c0_4] : memref<1x128x384xbf16, #tpu.memory_space<vmem>>, vector<1x128x384xbf16>
    %6 = vector.shape_cast %5 : vector<1x128x384xbf16> to vector<128x384xbf16>
    %cst = arith.constant dense<0.000000e+00> : vector<8x384xf32>
    %7 = tpu.matmul %4, %6, %cst {dimension_numbers = #tpu.dot_dimension_numbers<[1], [0], [0], [1], [0, 0, 1, 1], [], []>} : vector<8x128xbf16>, vector<128x384xbf16>, vector<8x384xf32> -> vector<8x384xf32>
    %c0_5 = arith.constant 0 : index
    %c0_6 = arith.constant 0 : index
    %c0_7 = arith.constant 0 : index
    %8 = vector.load %arg4[%c0_5, %c0_6, %c0_7] : memref<1x1x384xf32, #tpu.memory_space<vmem>>, vector<1x1x384xf32>
    %9 = vector.shape_cast %8 : vector<1x1x384xf32> to vector<1x384xf32>
    %10 = vector.broadcast %9 : vector<1x384xf32> to vector<8x384xf32>
    %11 = arith.addf %7, %10 : vector<8x384xf32>
    %12 = vector.extract_strided_slice %11 {offsets = [0, 0], sizes = [8, 128], strides = [1, 1]} : vector<8x384xf32> to vector<8x128xf32>
    %13 = vector.extract_strided_slice %11 {offsets = [0, 128], sizes = [8, 128], strides = [1, 1]} : vector<8x384xf32> to vector<8x128xf32>
    %14 = vector.extract_strided_slice %11 {offsets = [0, 256], sizes = [8, 128], strides = [1, 1]} : vector<8x384xf32> to vector<8x128xf32>
    %15 = vector.extract_strided_slice %12 {offsets = [0, 0], sizes = [8, 32], strides = [1, 1]} : vector<8x128xf32> to vector<8x32xf32>
    %16 = vector.shape_cast %15 : vector<8x32xf32> to vector<1x8x32xf32>
    %17 = arith.truncf %16 : vector<1x8x32xf32> to vector<1x8x32xbf16>
    %18 = vector.extract_strided_slice %13 {offsets = [0, 0], sizes = [8, 32], strides = [1, 1]} : vector<8x128xf32> to vector<8x32xf32>
    %19 = vector.shape_cast %18 : vector<8x32xf32> to vector<1x8x32xf32>
    %20 = arith.truncf %19 : vector<1x8x32xf32> to vector<1x8x32xbf16>
    %21 = vector.extract_strided_slice %14 {offsets = [0, 0], sizes = [8, 32], strides = [1, 1]} : vector<8x128xf32> to vector<8x32xf32>
    %22 = vector.shape_cast %21 : vector<8x32xf32> to vector<1x8x32xf32>
    %23 = arith.truncf %22 : vector<1x8x32xf32> to vector<1x8x32xbf16>
    "tpu.trace_start"() <{level = 10 : i32, message = "bqd,bkd->bqk"}> : () -> ()
    %cst_8 = arith.constant dense<0.000000e+00> : vector<1x8x8xf32>
    %24 = tpu.matmul %17, %20, %cst_8 {dimension_numbers = #tpu.dot_dimension_numbers<[2], [2], [1], [1], [0, 0, 0, 1, 1, 1], [0], [0]>} : vector<1x8x32xbf16>, vector<1x8x32xbf16>, vector<1x8x8xf32> -> vector<1x8x8xf32>
    "tpu.trace_stop"() : () -> ()
    %cst_9 = arith.constant 0.176776692 : f32
    %25 = vector.broadcast %cst_9 : f32 to vector<1x8x8xf32>
    %26 = arith.mulf %24, %25 : vector<1x8x8xf32>
    %cst_10 = arith.constant dense<0xFF800000> : vector<1x8xf32>
    %27 = vector.multi_reduction <maximumf>, %26, %cst_10 [2] : vector<1x8x8xf32> to vector<1x8xf32>
    %28 = vector.shape_cast %27 : vector<1x8xf32> to vector<1x8x1xf32>
    %29 = vector.broadcast %28 : vector<1x8x1xf32> to vector<1x8x8xf32>
    %30 = arith.subf %26, %29 : vector<1x8x8xf32>
    %31 = math.exp %30 : vector<1x8x8xf32>
    %cst_11 = arith.constant dense<0.000000e+00> : vector<1x8xf32>
    %32 = vector.multi_reduction <add>, %31, %cst_11 [2] : vector<1x8x8xf32> to vector<1x8xf32>
    %33 = vector.shape_cast %32 : vector<1x8xf32> to vector<1x8x1xf32>
    %34 = vector.broadcast %33 : vector<1x8x1xf32> to vector<1x8x8xf32>
    %35 = arith.divf %31, %34 : vector<1x8x8xf32>
    %c0_i32_12 = arith.constant 0 : i32
    %36 = arith.cmpi eq, %arg1, %c0_i32_12 : i32
    %37 = arith.extui %36 : i1 to i32
    %c0_i32_13 = arith.constant 0 : i32
    %38 = arith.cmpi ne, %37, %c0_i32_13 : i32
    scf.if %38 {
      %cst_90 = arith.constant 2.500000e-01 : f32
      %212 = vector.broadcast %cst_90 : f32 to vector<1x8x8xf32>
      %213 = arith.mulf %35, %212 : vector<1x8x8xf32>
      %c0_91 = arith.constant 0 : index
      %c0_92 = arith.constant 0 : index
      %c0_93 = arith.constant 0 : index
      %214 = vector.load %arg16[%c0_91, %c0_92, %c0_93] : memref<1x8x8xf32, #tpu.memory_space<vmem>>, vector<1x8x8xf32>
      tpu.vector_store %arg16[%c0_91, %c0_92, %c0_93], %213 {strides = array<i32>} : memref<1x8x8xf32, #tpu.memory_space<vmem>>, vector<1x8x8xf32>,
    } else {
    }
    %39 = arith.truncf %35 : vector<1x8x8xf32> to vector<1x8x8xbf16>
    "tpu.trace_start"() <{level = 10 : i32, message = "bqk,bkd->bqd"}> : () -> ()
    %cst_14 = arith.constant dense<0.000000e+00> : vector<1x8x32xf32>
    %40 = tpu.matmul %39, %23, %cst_14 {dimension_numbers = #tpu.dot_dimension_numbers<[2], [1], [1], [2], [0, 0, 0, 1, 1, 2], [0], [0]>} : vector<1x8x8xbf16>, vector<1x8x32xbf16>, vector<1x8x32xf32> -> vector<1x8x32xf32>
    "tpu.trace_stop"() : () -> ()
    %41 = vector.shape_cast %40 : vector<1x8x32xf32> to vector<8x32xf32>
    %c0_15 = arith.constant 0 : index
    %c0_16 = arith.constant 0 : index
    %42 = vector.load %arg18[%c0_15, %c0_16] : memref<8x128xf32, #tpu.memory_space<vmem>>, vector<8x32xf32>
    tpu.vector_store %arg18[%c0_15, %c0_16], %41 {strides = array<i32>} : memref<8x128xf32, #tpu.memory_space<vmem>>, vector<8x32xf32>,
    %43 = vector.extract_strided_slice %12 {offsets = [0, 32], sizes = [8, 32], strides = [1, 1]} : vector<8x128xf32> to vector<8x32xf32>
    %44 = vector.shape_cast %43 : vector<8x32xf32> to vector<1x8x32xf32>
    %45 = arith.truncf %44 : vector<1x8x32xf32> to vector<1x8x32xbf16>
    %46 = vector.extract_strided_slice %13 {offsets = [0, 32], sizes = [8, 32], strides = [1, 1]} : vector<8x128xf32> to vector<8x32xf32>
    %47 = vector.shape_cast %46 : vector<8x32xf32> to vector<1x8x32xf32>
    %48 = arith.truncf %47 : vector<1x8x32xf32> to vector<1x8x32xbf16>
    %49 = vector.extract_strided_slice %14 {offsets = [0, 32], sizes = [8, 32], strides = [1, 1]} : vector<8x128xf32> to vector<8x32xf32>
    %50 = vector.shape_cast %49 : vector<8x32xf32> to vector<1x8x32xf32>
    %51 = arith.truncf %50 : vector<1x8x32xf32> to vector<1x8x32xbf16>
    "tpu.trace_start"() <{level = 10 : i32, message = "bqd,bkd->bqk"}> : () -> ()
    %cst_17 = arith.constant dense<0.000000e+00> : vector<1x8x8xf32>
    %52 = tpu.matmul %45, %48, %cst_17 {dimension_numbers = #tpu.dot_dimension_numbers<[2], [2], [1], [1], [0, 0, 0, 1, 1, 1], [0], [0]>} : vector<1x8x32xbf16>, vector<1x8x32xbf16>, vector<1x8x8xf32> -> vector<1x8x8xf32>
    "tpu.trace_stop"() : () -> ()
    %cst_18 = arith.constant 0.176776692 : f32
    %53 = vector.broadcast %cst_18 : f32 to vector<1x8x8xf32>
    %54 = arith.mulf %52, %53 : vector<1x8x8xf32>
    %cst_19 = arith.constant dense<0xFF800000> : vector<1x8xf32>
    %55 = vector.multi_reduction <maximumf>, %54, %cst_19 [2] : vector<1x8x8xf32> to vector<1x8xf32>
    %56 = vector.shape_cast %55 : vector<1x8xf32> to vector<1x8x1xf32>
    %57 = vector.broadcast %56 : vector<1x8x1xf32> to vector<1x8x8xf32>
    %58 = arith.subf %54, %57 : vector<1x8x8xf32>
    %59 = math.exp %58 : vector<1x8x8xf32>
    %cst_20 = arith.constant dense<0.000000e+00> : vector<1x8xf32>
    %60 = vector.multi_reduction <add>, %59, %cst_20 [2] : vector<1x8x8xf32> to vector<1x8xf32>
    %61 = vector.shape_cast %60 : vector<1x8xf32> to vector<1x8x1xf32>
    %62 = vector.broadcast %61 : vector<1x8x1xf32> to vector<1x8x8xf32>
    %63 = arith.divf %59, %62 : vector<1x8x8xf32>
    %c0_i32_21 = arith.constant 0 : i32
    %64 = arith.cmpi eq, %arg1, %c0_i32_21 : i32
    %65 = arith.extui %64 : i1 to i32
    %c0_i32_22 = arith.constant 0 : i32
    %66 = arith.cmpi ne, %65, %c0_i32_22 : i32
    scf.if %66 {
      %c0_90 = arith.constant 0 : index
      %c0_91 = arith.constant 0 : index
      %c0_92 = arith.constant 0 : index
      %212 = vector.load %arg16[%c0_90, %c0_91, %c0_92] : memref<1x8x8xf32, #tpu.memory_space<vmem>>, vector<1x8x8xf32>
      %cst_93 = arith.constant 2.500000e-01 : f32
      %213 = vector.broadcast %cst_93 : f32 to vector<1x8x8xf32>
      %214 = arith.mulf %63, %213 : vector<1x8x8xf32>
      %215 = arith.addf %212, %214 : vector<1x8x8xf32>
      %c0_94 = arith.constant 0 : index
      %c0_95 = arith.constant 0 : index
      %c0_96 = arith.constant 0 : index
      %216 = vector.load %arg16[%c0_94, %c0_95, %c0_96] : memref<1x8x8xf32, #tpu.memory_space<vmem>>, vector<1x8x8xf32>
      tpu.vector_store %arg16[%c0_94, %c0_95, %c0_96], %215 {strides = array<i32>} : memref<1x8x8xf32, #tpu.memory_space<vmem>>, vector<1x8x8xf32>,
    } else {
    }
    %67 = arith.truncf %63 : vector<1x8x8xf32> to vector<1x8x8xbf16>
    "tpu.trace_start"() <{level = 10 : i32, message = "bqk,bkd->bqd"}> : () -> ()
    %cst_23 = arith.constant dense<0.000000e+00> : vector<1x8x32xf32>
    %68 = tpu.matmul %67, %51, %cst_23 {dimension_numbers = #tpu.dot_dimension_numbers<[2], [1], [1], [2], [0, 0, 0, 1, 1, 2], [0], [0]>} : vector<1x8x8xbf16>, vector<1x8x32xbf16>, vector<1x8x32xf32> -> vector<1x8x32xf32>
    "tpu.trace_stop"() : () -> ()
    %69 = vector.shape_cast %68 : vector<1x8x32xf32> to vector<8x32xf32>
    %c0_24 = arith.constant 0 : index
    %c32 = arith.constant 32 : index
    %70 = vector.load %arg18[%c0_24, %c32] : memref<8x128xf32, #tpu.memory_space<vmem>>, vector<8x32xf32>
    tpu.vector_store %arg18[%c0_24, %c32], %69 {strides = array<i32>} : memref<8x128xf32, #tpu.memory_space<vmem>>, vector<8x32xf32>,
    %71 = vector.extract_strided_slice %12 {offsets = [0, 64], sizes = [8, 32], strides = [1, 1]} : vector<8x128xf32> to vector<8x32xf32>
    %72 = vector.shape_cast %71 : vector<8x32xf32> to vector<1x8x32xf32>
    %73 = arith.truncf %72 : vector<1x8x32xf32> to vector<1x8x32xbf16>
    %74 = vector.extract_strided_slice %13 {offsets = [0, 64], sizes = [8, 32], strides = [1, 1]} : vector<8x128xf32> to vector<8x32xf32>
    %75 = vector.shape_cast %74 : vector<8x32xf32> to vector<1x8x32xf32>
    %76 = arith.truncf %75 : vector<1x8x32xf32> to vector<1x8x32xbf16>
    %77 = vector.extract_strided_slice %14 {offsets = [0, 64], sizes = [8, 32], strides = [1, 1]} : vector<8x128xf32> to vector<8x32xf32>
    %78 = vector.shape_cast %77 : vector<8x32xf32> to vector<1x8x32xf32>
    %79 = arith.truncf %78 : vector<1x8x32xf32> to vector<1x8x32xbf16>
    "tpu.trace_start"() <{level = 10 : i32, message = "bqd,bkd->bqk"}> : () -> ()
    %cst_25 = arith.constant dense<0.000000e+00> : vector<1x8x8xf32>
    %80 = tpu.matmul %73, %76, %cst_25 {dimension_numbers = #tpu.dot_dimension_numbers<[2], [2], [1], [1], [0, 0, 0, 1, 1, 1], [0], [0]>} : vector<1x8x32xbf16>, vector<1x8x32xbf16>, vector<1x8x8xf32> -> vector<1x8x8xf32>
    "tpu.trace_stop"() : () -> ()
    %cst_26 = arith.constant 0.176776692 : f32
    %81 = vector.broadcast %cst_26 : f32 to vector<1x8x8xf32>
    %82 = arith.mulf %80, %81 : vector<1x8x8xf32>
    %cst_27 = arith.constant dense<0xFF800000> : vector<1x8xf32>
    %83 = vector.multi_reduction <maximumf>, %82, %cst_27 [2] : vector<1x8x8xf32> to vector<1x8xf32>
    %84 = vector.shape_cast %83 : vector<1x8xf32> to vector<1x8x1xf32>
    %85 = vector.broadcast %84 : vector<1x8x1xf32> to vector<1x8x8xf32>
    %86 = arith.subf %82, %85 : vector<1x8x8xf32>
    %87 = math.exp %86 : vector<1x8x8xf32>
    %cst_28 = arith.constant dense<0.000000e+00> : vector<1x8xf32>
    %88 = vector.multi_reduction <add>, %87, %cst_28 [2] : vector<1x8x8xf32> to vector<1x8xf32>
    %89 = vector.shape_cast %88 : vector<1x8xf32> to vector<1x8x1xf32>
    %90 = vector.broadcast %89 : vector<1x8x1xf32> to vector<1x8x8xf32>
    %91 = arith.divf %87, %90 : vector<1x8x8xf32>
    %c0_i32_29 = arith.constant 0 : i32
    %92 = arith.cmpi eq, %arg1, %c0_i32_29 : i32
    %93 = arith.extui %92 : i1 to i32
    %c0_i32_30 = arith.constant 0 : i32
    %94 = arith.cmpi ne, %93, %c0_i32_30 : i32
    scf.if %94 {
      %c0_90 = arith.constant 0 : index
      %c0_91 = arith.constant 0 : index
      %c0_92 = arith.constant 0 : index
      %212 = vector.load %arg16[%c0_90, %c0_91, %c0_92] : memref<1x8x8xf32, #tpu.memory_space<vmem>>, vector<1x8x8xf32>
      %cst_93 = arith.constant 2.500000e-01 : f32
      %213 = vector.broadcast %cst_93 : f32 to vector<1x8x8xf32>
      %214 = arith.mulf %91, %213 : vector<1x8x8xf32>
      %215 = arith.addf %212, %214 : vector<1x8x8xf32>
      %c0_94 = arith.constant 0 : index
      %c0_95 = arith.constant 0 : index
      %c0_96 = arith.constant 0 : index
      %216 = vector.load %arg16[%c0_94, %c0_95, %c0_96] : memref<1x8x8xf32, #tpu.memory_space<vmem>>, vector<1x8x8xf32>
      tpu.vector_store %arg16[%c0_94, %c0_95, %c0_96], %215 {strides = array<i32>} : memref<1x8x8xf32, #tpu.memory_space<vmem>>, vector<1x8x8xf32>,
    } else {
    }
    %95 = arith.truncf %91 : vector<1x8x8xf32> to vector<1x8x8xbf16>
    "tpu.trace_start"() <{level = 10 : i32, message = "bqk,bkd->bqd"}> : () -> ()
    %cst_31 = arith.constant dense<0.000000e+00> : vector<1x8x32xf32>
    %96 = tpu.matmul %95, %79, %cst_31 {dimension_numbers = #tpu.dot_dimension_numbers<[2], [1], [1], [2], [0, 0, 0, 1, 1, 2], [0], [0]>} : vector<1x8x8xbf16>, vector<1x8x32xbf16>, vector<1x8x32xf32> -> vector<1x8x32xf32>
    "tpu.trace_stop"() : () -> ()
    %97 = vector.shape_cast %96 : vector<1x8x32xf32> to vector<8x32xf32>
    %c0_32 = arith.constant 0 : index
    %c64 = arith.constant 64 : index
    %98 = vector.load %arg18[%c0_32, %c64] : memref<8x128xf32, #tpu.memory_space<vmem>>, vector<8x32xf32>
    tpu.vector_store %arg18[%c0_32, %c64], %97 {strides = array<i32>} : memref<8x128xf32, #tpu.memory_space<vmem>>, vector<8x32xf32>,
    %99 = vector.extract_strided_slice %12 {offsets = [0, 96], sizes = [8, 32], strides = [1, 1]} : vector<8x128xf32> to vector<8x32xf32>
    %100 = vector.shape_cast %99 : vector<8x32xf32> to vector<1x8x32xf32>
    %101 = arith.truncf %100 : vector<1x8x32xf32> to vector<1x8x32xbf16>
    %102 = vector.extract_strided_slice %13 {offsets = [0, 96], sizes = [8, 32], strides = [1, 1]} : vector<8x128xf32> to vector<8x32xf32>
    %103 = vector.shape_cast %102 : vector<8x32xf32> to vector<1x8x32xf32>
    %104 = arith.truncf %103 : vector<1x8x32xf32> to vector<1x8x32xbf16>
    %105 = vector.extract_strided_slice %14 {offsets = [0, 96], sizes = [8, 32], strides = [1, 1]} : vector<8x128xf32> to vector<8x32xf32>
    %106 = vector.shape_cast %105 : vector<8x32xf32> to vector<1x8x32xf32>
    %107 = arith.truncf %106 : vector<1x8x32xf32> to vector<1x8x32xbf16>
    "tpu.trace_start"() <{level = 10 : i32, message = "bqd,bkd->bqk"}> : () -> ()
    %cst_33 = arith.constant dense<0.000000e+00> : vector<1x8x8xf32>
    %108 = tpu.matmul %101, %104, %cst_33 {dimension_numbers = #tpu.dot_dimension_numbers<[2], [2], [1], [1], [0, 0, 0, 1, 1, 1], [0], [0]>} : vector<1x8x32xbf16>, vector<1x8x32xbf16>, vector<1x8x8xf32> -> vector<1x8x8xf32>
    "tpu.trace_stop"() : () -> ()
    %cst_34 = arith.constant 0.176776692 : f32
    %109 = vector.broadcast %cst_34 : f32 to vector<1x8x8xf32>
    %110 = arith.mulf %108, %109 : vector<1x8x8xf32>
    %cst_35 = arith.constant dense<0xFF800000> : vector<1x8xf32>
    %111 = vector.multi_reduction <maximumf>, %110, %cst_35 [2] : vector<1x8x8xf32> to vector<1x8xf32>
    %112 = vector.shape_cast %111 : vector<1x8xf32> to vector<1x8x1xf32>
    %113 = vector.broadcast %112 : vector<1x8x1xf32> to vector<1x8x8xf32>
    %114 = arith.subf %110, %113 : vector<1x8x8xf32>
    %115 = math.exp %114 : vector<1x8x8xf32>
    %cst_36 = arith.constant dense<0.000000e+00> : vector<1x8xf32>
    %116 = vector.multi_reduction <add>, %115, %cst_36 [2] : vector<1x8x8xf32> to vector<1x8xf32>
    %117 = vector.shape_cast %116 : vector<1x8xf32> to vector<1x8x1xf32>
    %118 = vector.broadcast %117 : vector<1x8x1xf32> to vector<1x8x8xf32>
    %119 = arith.divf %115, %118 : vector<1x8x8xf32>
    %c0_i32_37 = arith.constant 0 : i32
    %120 = arith.cmpi eq, %arg1, %c0_i32_37 : i32
    %121 = arith.extui %120 : i1 to i32
    %c0_i32_38 = arith.constant 0 : i32
    %122 = arith.cmpi ne, %121, %c0_i32_38 : i32
    scf.if %122 {
      %c0_90 = arith.constant 0 : index
      %c0_91 = arith.constant 0 : index
      %c0_92 = arith.constant 0 : index
      %212 = vector.load %arg16[%c0_90, %c0_91, %c0_92] : memref<1x8x8xf32, #tpu.memory_space<vmem>>, vector<1x8x8xf32>
      %cst_93 = arith.constant 2.500000e-01 : f32
      %213 = vector.broadcast %cst_93 : f32 to vector<1x8x8xf32>
      %214 = arith.mulf %119, %213 : vector<1x8x8xf32>
      %215 = arith.addf %212, %214 : vector<1x8x8xf32>
      %c0_94 = arith.constant 0 : index
      %c0_95 = arith.constant 0 : index
      %c0_96 = arith.constant 0 : index
      %216 = vector.load %arg16[%c0_94, %c0_95, %c0_96] : memref<1x8x8xf32, #tpu.memory_space<vmem>>, vector<1x8x8xf32>
      tpu.vector_store %arg16[%c0_94, %c0_95, %c0_96], %215 {strides = array<i32>} : memref<1x8x8xf32, #tpu.memory_space<vmem>>, vector<1x8x8xf32>,
    } else {
    }
    %123 = arith.truncf %119 : vector<1x8x8xf32> to vector<1x8x8xbf16>
    "tpu.trace_start"() <{level = 10 : i32, message = "bqk,bkd->bqd"}> : () -> ()
    %cst_39 = arith.constant dense<0.000000e+00> : vector<1x8x32xf32>
    %124 = tpu.matmul %123, %107, %cst_39 {dimension_numbers = #tpu.dot_dimension_numbers<[2], [1], [1], [2], [0, 0, 0, 1, 1, 2], [0], [0]>} : vector<1x8x8xbf16>, vector<1x8x32xbf16>, vector<1x8x32xf32> -> vector<1x8x32xf32>
    "tpu.trace_stop"() : () -> ()
    %125 = vector.shape_cast %124 : vector<1x8x32xf32> to vector<8x32xf32>
    %c0_40 = arith.constant 0 : index
    %c96 = arith.constant 96 : index
    %126 = vector.load %arg18[%c0_40, %c96] : memref<8x128xf32, #tpu.memory_space<vmem>>, vector<8x32xf32>
    tpu.vector_store %arg18[%c0_40, %c96], %125 {strides = array<i32>} : memref<8x128xf32, #tpu.memory_space<vmem>>, vector<8x32xf32>,
    %c0_41 = arith.constant 0 : index
    %c0_42 = arith.constant 0 : index
    %127 = vector.load %arg18[%c0_41, %c0_42] : memref<8x128xf32, #tpu.memory_space<vmem>>, vector<8x128xf32>
    %128 = arith.truncf %127 : vector<8x128xf32> to vector<8x128xbf16>
    %c0_43 = arith.constant 0 : index
    %c0_44 = arith.constant 0 : index
    %c0_45 = arith.constant 0 : index
    %129 = vector.load %arg5[%c0_43, %c0_44, %c0_45] : memref<1x128x128xbf16, #tpu.memory_space<vmem>>, vector<1x128x128xbf16>
    %130 = vector.shape_cast %129 : vector<1x128x128xbf16> to vector<128x128xbf16>
    %cst_46 = arith.constant dense<0.000000e+00> : vector<8x128xf32>
    %131 = tpu.matmul %128, %130, %cst_46 {dimension_numbers = #tpu.dot_dimension_numbers<[1], [0], [0], [1], [0, 0, 1, 1], [], []>} : vector<8x128xbf16>, vector<128x128xbf16>, vector<8x128xf32> -> vector<8x128xf32>
    %c0_47 = arith.constant 0 : index
    %c0_48 = arith.constant 0 : index
    %c0_49 = arith.constant 0 : index
    %132 = vector.load %arg6[%c0_47, %c0_48, %c0_49] : memref<1x1x128xf32, #tpu.memory_space<vmem>>, vector<1x1x128xf32>
    %133 = vector.shape_cast %132 : vector<1x1x128xf32> to vector<1x128xf32>
    %134 = vector.broadcast %133 : vector<1x128xf32> to vector<8x128xf32>
    %135 = arith.addf %131, %134 : vector<8x128xf32>
    %136 = arith.addf %3, %135 : vector<8x128xf32>
    %c0_50 = arith.constant 0 : index
    %c0_51 = arith.constant 0 : index
    %c0_52 = arith.constant 0 : index
    %137 = vector.load %arg11[%c0_50, %c0_51, %c0_52] : memref<1x1x128xf32, #tpu.memory_space<vmem>>, vector<1x1x128xf32>
    %138 = vector.shape_cast %137 : vector<1x1x128xf32> to vector<1x128xf32>
    %c0_53 = arith.constant 0 : index
    %c0_54 = arith.constant 0 : index
    %c0_55 = arith.constant 0 : index
    %139 = vector.load %arg12[%c0_53, %c0_54, %c0_55] : memref<1x1x128xf32, #tpu.memory_space<vmem>>, vector<1x1x128xf32>
    %140 = vector.shape_cast %139 : vector<1x1x128xf32> to vector<1x128xf32>
    %cst_56 = arith.constant dense<0.000000e+00> : vector<8xf32>
    %141 = vector.multi_reduction <add>, %136, %cst_56 [1] : vector<8x128xf32> to vector<8xf32>
    %142 = vector.shape_cast %141 : vector<8xf32> to vector<8x1xf32>
    %cst_57 = arith.constant 1.280000e+02 : f32
    %143 = vector.broadcast %cst_57 : f32 to vector<8x1xf32>
    %144 = arith.divf %142, %143 : vector<8x1xf32>
    %145 = vector.broadcast %144 : vector<8x1xf32> to vector<8x128xf32>
    %146 = arith.subf %136, %145 : vector<8x128xf32>
    %147 = arith.mulf %146, %146 : vector<8x128xf32>
    %cst_58 = arith.constant dense<0.000000e+00> : vector<8xf32>
    %148 = vector.multi_reduction <add>, %147, %cst_58 [1] : vector<8x128xf32> to vector<8xf32>
    %149 = vector.shape_cast %148 : vector<8xf32> to vector<8x1xf32>
    %cst_59 = arith.constant 1.280000e+02 : f32
    %150 = vector.broadcast %cst_59 : f32 to vector<8x1xf32>
    %151 = arith.divf %149, %150 : vector<8x1xf32>
    %152 = vector.broadcast %144 : vector<8x1xf32> to vector<8x128xf32>
    %153 = arith.subf %136, %152 : vector<8x128xf32>
    %cst_60 = arith.constant 9.99999974E-6 : f32
    %154 = vector.broadcast %cst_60 : f32 to vector<8x1xf32>
    %155 = arith.addf %151, %154 : vector<8x1xf32>
    %156 = math.rsqrt %155 : vector<8x1xf32>
    %157 = vector.broadcast %156 : vector<8x1xf32> to vector<8x128xf32>
    %158 = arith.mulf %153, %157 : vector<8x128xf32>
    %159 = vector.broadcast %138 : vector<1x128xf32> to vector<8x128xf32>
    %160 = arith.mulf %158, %159 : vector<8x128xf32>
    %161 = vector.broadcast %140 : vector<1x128xf32> to vector<8x128xf32>
    %162 = arith.addf %160, %161 : vector<8x128xf32>
    %163 = arith.truncf %162 : vector<8x128xf32> to vector<8x128xbf16>
    %c0_61 = arith.constant 0 : index
    %c0_62 = arith.constant 0 : index
    %c0_63 = arith.constant 0 : index
    %164 = vector.load %arg7[%c0_61, %c0_62, %c0_63] : memref<1x128x256xbf16, #tpu.memory_space<vmem>>, vector<1x128x256xbf16>
    %165 = vector.shape_cast %164 : vector<1x128x256xbf16> to vector<128x256xbf16>
    %cst_64 = arith.constant dense<0.000000e+00> : vector<8x256xf32>
    %166 = tpu.matmul %163, %165, %cst_64 {dimension_numbers = #tpu.dot_dimension_numbers<[1], [0], [0], [1], [0, 0, 1, 1], [], []>} : vector<8x128xbf16>, vector<128x256xbf16>, vector<8x256xf32> -> vector<8x256xf32>
    %c0_65 = arith.constant 0 : index
    %c0_66 = arith.constant 0 : index
    %c0_67 = arith.constant 0 : index
    %167 = vector.load %arg8[%c0_65, %c0_66, %c0_67] : memref<1x1x256xf32, #tpu.memory_space<vmem>>, vector<1x1x256xf32>
    %168 = vector.shape_cast %167 : vector<1x1x256xf32> to vector<1x256xf32>
    %169 = vector.broadcast %168 : vector<1x256xf32> to vector<8x256xf32>
    %170 = arith.addf %166, %169 : vector<8x256xf32>
    %cst_68 = arith.constant 0.000000e+00 : f32
    %171 = vector.broadcast %cst_68 : f32 to vector<8x256xf32>
    %172 = arith.maximumf %170, %171 : vector<8x256xf32>
    %173 = arith.truncf %172 : vector<8x256xf32> to vector<8x256xbf16>
    %c0_69 = arith.constant 0 : index
    %c0_70 = arith.constant 0 : index
    %c0_71 = arith.constant 0 : index
    %174 = vector.load %arg9[%c0_69, %c0_70, %c0_71] : memref<1x256x128xbf16, #tpu.memory_space<vmem>>, vector<1x256x128xbf16>
    %175 = vector.shape_cast %174 : vector<1x256x128xbf16> to vector<256x128xbf16>
    %cst_72 = arith.constant dense<0.000000e+00> : vector<8x128xf32>
    %176 = tpu.matmul %173, %175, %cst_72 {dimension_numbers = #tpu.dot_dimension_numbers<[1], [0], [0], [1], [0, 0, 1, 1], [], []>} : vector<8x256xbf16>, vector<256x128xbf16>, vector<8x128xf32> -> vector<8x128xf32>
    %c0_73 = arith.constant 0 : index
    %c0_74 = arith.constant 0 : index
    %c0_75 = arith.constant 0 : index
    %177 = vector.load %arg10[%c0_73, %c0_74, %c0_75] : memref<1x1x128xf32, #tpu.memory_space<vmem>>, vector<1x1x128xf32>
    %178 = vector.shape_cast %177 : vector<1x1x128xf32> to vector<1x128xf32>
    %179 = vector.broadcast %178 : vector<1x128xf32> to vector<8x128xf32>
    %180 = arith.addf %176, %179 : vector<8x128xf32>
    %181 = arith.addf %162, %180 : vector<8x128xf32>
    %c0_76 = arith.constant 0 : index
    %c0_77 = arith.constant 0 : index
    %c0_78 = arith.constant 0 : index
    %182 = vector.load %arg13[%c0_76, %c0_77, %c0_78] : memref<1x1x128xf32, #tpu.memory_space<vmem>>, vector<1x1x128xf32>
    %183 = vector.shape_cast %182 : vector<1x1x128xf32> to vector<1x128xf32>
    %c0_79 = arith.constant 0 : index
    %c0_80 = arith.constant 0 : index
    %c0_81 = arith.constant 0 : index
    %184 = vector.load %arg14[%c0_79, %c0_80, %c0_81] : memref<1x1x128xf32, #tpu.memory_space<vmem>>, vector<1x1x128xf32>
    %185 = vector.shape_cast %184 : vector<1x1x128xf32> to vector<1x128xf32>
    %cst_82 = arith.constant dense<0.000000e+00> : vector<8xf32>
    %186 = vector.multi_reduction <add>, %181, %cst_82 [1] : vector<8x128xf32> to vector<8xf32>
    %187 = vector.shape_cast %186 : vector<8xf32> to vector<8x1xf32>
    %cst_83 = arith.constant 1.280000e+02 : f32
    %188 = vector.broadcast %cst_83 : f32 to vector<8x1xf32>
    %189 = arith.divf %187, %188 : vector<8x1xf32>
    %190 = vector.broadcast %189 : vector<8x1xf32> to vector<8x128xf32>
    %191 = arith.subf %181, %190 : vector<8x128xf32>
    %192 = arith.mulf %191, %191 : vector<8x128xf32>
    %cst_84 = arith.constant dense<0.000000e+00> : vector<8xf32>
    %193 = vector.multi_reduction <add>, %192, %cst_84 [1] : vector<8x128xf32> to vector<8xf32>
    %194 = vector.shape_cast %193 : vector<8xf32> to vector<8x1xf32>
    %cst_85 = arith.constant 1.280000e+02 : f32
    %195 = vector.broadcast %cst_85 : f32 to vector<8x1xf32>
    %196 = arith.divf %194, %195 : vector<8x1xf32>
    %197 = vector.broadcast %189 : vector<8x1xf32> to vector<8x128xf32>
    %198 = arith.subf %181, %197 : vector<8x128xf32>
    %cst_86 = arith.constant 9.99999974E-6 : f32
    %199 = vector.broadcast %cst_86 : f32 to vector<8x1xf32>
    %200 = arith.addf %196, %199 : vector<8x1xf32>
    %201 = math.rsqrt %200 : vector<8x1xf32>
    %202 = vector.broadcast %201 : vector<8x1xf32> to vector<8x128xf32>
    %203 = arith.mulf %198, %202 : vector<8x128xf32>
    %204 = vector.broadcast %183 : vector<1x128xf32> to vector<8x128xf32>
    %205 = arith.mulf %203, %204 : vector<8x128xf32>
    %206 = vector.broadcast %185 : vector<1x128xf32> to vector<8x128xf32>
    %207 = arith.addf %205, %206 : vector<8x128xf32>
    %c0_87 = arith.constant 0 : index
    %c0_88 = arith.constant 0 : index
    %208 = vector.load %arg17[%c0_87, %c0_88] : memref<8x128xf32, #tpu.memory_space<vmem>>, vector<8x128xf32>
    tpu.vector_store %arg17[%c0_87, %c0_88], %207 {strides = array<i32>} : memref<8x128xf32, #tpu.memory_space<vmem>>, vector<8x128xf32>,
    %c1_i32 = arith.constant 1 : i32
    %209 = arith.cmpi eq, %arg1, %c1_i32 : i32
    %210 = arith.extui %209 : i1 to i32
    %c0_i32_89 = arith.constant 0 : i32
    %211 = arith.cmpi ne, %210, %c0_i32_89 : i32
    scf.if %211 {
      %c0_90 = arith.constant 0 : index
      %c0_91 = arith.constant 0 : index
      %212 = vector.load %arg15[%c0_90, %c0_91] : memref<8x128xf32, #tpu.memory_space<vmem>>, vector<8x128xf32>
      tpu.vector_store %arg15[%c0_90, %c0_91], %207 {strides = array<i32>} : memref<8x128xf32, #tpu.memory_space<vmem>>, vector<8x128xf32>,
    } else {
    }
    return
  }
  func.func @transform_1(%arg0: i32, %arg1: i32) -> (i32, i32, i32) {
    %c0_i32 = arith.constant 0 : i32
    %c0_i32_0 = arith.constant 0 : i32
    %c0_i32_1 = arith.constant 0 : i32
    return %arg1, %c0_i32, %c0_i32_0 : i32, i32, i32
  }
  func.func @transform_2(%arg0: i32, %arg1: i32) -> (i32, i32, i32) {
    %c0_i32 = arith.constant 0 : i32
    %c0_i32_0 = arith.constant 0 : i32
    %c0_i32_1 = arith.constant 0 : i32
    return %arg1, %c0_i32, %c0_i32_0 : i32, i32, i32
  }
  func.func @transform_3(%arg0: i32, %arg1: i32) -> (i32, i32, i32) {
    %c0_i32 = arith.constant 0 : i32
    %c0_i32_0 = arith.constant 0 : i32
    %c0_i32_1 = arith.constant 0 : i32
    return %arg1, %c0_i32, %c0_i32_0 : i32, i32, i32
  }
  func.func @transform_4(%arg0: i32, %arg1: i32) -> (i32, i32, i32) {
    %c0_i32 = arith.constant 0 : i32
    %c0_i32_0 = arith.constant 0 : i32
    %c0_i32_1 = arith.constant 0 : i32
    return %arg1, %c0_i32, %c0_i32_0 : i32, i32, i32
  }
  func.func @transform_5(%arg0: i32, %arg1: i32) -> (i32, i32, i32) {
    %c0_i32 = arith.constant 0 : i32
    %c0_i32_0 = arith.constant 0 : i32
    %c0_i32_1 = arith.constant 0 : i32
    return %arg1, %c0_i32, %c0_i32_0 : i32, i32, i32
  }
  func.func @transform_6(%arg0: i32, %arg1: i32) -> (i32, i32, i32) {
    %c0_i32 = arith.constant 0 : i32
    %c0_i32_0 = arith.constant 0 : i32
    %c0_i32_1 = arith.constant 0 : i32
    return %arg1, %c0_i32, %c0_i32_0 : i32, i32, i32
  }
  func.func @transform_7(%arg0: i32, %arg1: i32) -> (i32, i32, i32) {
    %c0_i32 = arith.constant 0 : i32
    %c0_i32_0 = arith.constant 0 : i32
    %c0_i32_1 = arith.constant 0 : i32
    return %arg1, %c0_i32, %c0_i32_0 : i32, i32, i32
  }
  func.func @transform_8(%arg0: i32, %arg1: i32) -> (i32, i32, i32) {
    %c0_i32 = arith.constant 0 : i32
    %c0_i32_0 = arith.constant 0 : i32
    %c0_i32_1 = arith.constant 0 : i32
    return %arg1, %c0_i32, %c0_i32_0 : i32, i32, i32
  }
  func.func @transform_9(%arg0: i32, %arg1: i32) -> (i32, i32, i32) {
    %c0_i32 = arith.constant 0 : i32
    %c0_i32_0 = arith.constant 0 : i32
    %c0_i32_1 = arith.constant 0 : i32
    return %arg1, %c0_i32, %c0_i32_0 : i32, i32, i32
  }
  func.func @transform_10(%arg0: i32, %arg1: i32) -> (i32, i32, i32) {
    %c0_i32 = arith.constant 0 : i32
    %c0_i32_0 = arith.constant 0 : i32
    %c0_i32_1 = arith.constant 0 : i32
    return %arg1, %c0_i32, %c0_i32_0 : i32, i32, i32
  }
  func.func @transform_11(%arg0: i32, %arg1: i32) -> (i32, i32, i32) {
    %c0_i32 = arith.constant 0 : i32
    %c0_i32_0 = arith.constant 0 : i32
    %c0_i32_1 = arith.constant 0 : i32
    return %arg1, %c0_i32, %c0_i32_0 : i32, i32, i32
  }
  func.func @transform_12(%arg0: i32, %arg1: i32) -> (i32, i32, i32) {
    %c0_i32 = arith.constant 0 : i32
    %c0_i32_0 = arith.constant 0 : i32
    %c0_i32_1 = arith.constant 0 : i32
    return %arg1, %c0_i32, %c0_i32_0 : i32, i32, i32
  }
  func.func @transform_13(%arg0: i32, %arg1: i32) -> (i32, i32) {
    %c0_i32 = arith.constant 0 : i32
    %c0_i32_0 = arith.constant 0 : i32
    return %arg0, %c0_i32 : i32, i32
  }
  func.func @transform_14(%arg0: i32, %arg1: i32) -> (i32, i32, i32) {
    %c0_i32 = arith.constant 0 : i32
    %c0_i32_0 = arith.constant 0 : i32
    %c0_i32_1 = arith.constant 0 : i32
    return %arg0, %c0_i32, %c0_i32_0 : i32, i32, i32
  }
}

</mosaic_0001>

<llo_original>
// kernel: tpu_custom_call.1
$region0: #{tpu_custom_call.1}
  #allocation0 [shape = 'u32[]', space=smem, size = 0x4, offset = 0x4, fixed_abs, tag = 'smem constant byte address 0x4 - core index']
  #allocation1 [shape = 'u32[144,128]{1,0:T(1,128)}', space=vmem, size = 0x12000, scoped, tag = 'internal scratch']
  #allocation2 [shape = 'f32[8,128]{1,0:T(8,128)}', space=vmem, size = 0x1000, scoped, tag = 'scratch operand']
  #allocation3 [shape = 'f32[8,128]{1,0:T(8,128)}', space=vmem, size = 0x1000, scoped, tag = 'scratch operand']
  #allocation4 [shape = 's32[1]{0}', space=sflag, size = 0x4, scoped, tag = 'scratch operand']
  #allocation16 [shape = 's32[]', space=sflag, size = 0x4, offset = 0, fixed_abs, tag = 'sflag constant byte address 0x0 - dummy sync flag']
  #allocation17 [shape = 's32[]', space=sflag, size = 0x4, offset = 0, fixed_abs, tag = 'sflag constant byte address 0x0 - dummy sync flag']
  #allocation18 [shape = 'u32[]', space=smem, size = 0x4, offset = 0x44, fixed_abs, tag = 'smem constant byte address 0x44 - assertion arg 0']
  #allocation19 [shape = 'u32[]', space=smem, size = 0x4, offset = 0x48, fixed_abs, tag = 'smem constant byte address 0x48 - assertion arg 1']
  %s0 = inlined_call_operand.hbm [shape: f32[16,128], index: 0, kind: input, shape index: {}]
  %s1 = inlined_call_operand.hbm [shape: bf16[2,128,384], index: 1, kind: input, shape index: {}]
  %s2 = inlined_call_operand.vmem [shape: f32[2,1,384], index: 2, kind: input, shape index: {}]
  %s3 = inlined_call_operand.hbm [shape: bf16[2,128,128], index: 3, kind: input, shape index: {}]
  %s4 = inlined_call_operand.vmem [shape: f32[2,1,128], index: 4, kind: input, shape index: {}]
  %s5 = inlined_call_operand.hbm [shape: bf16[2,128,256], index: 5, kind: input, shape index: {}]
  %s6 = inlined_call_operand.vmem [shape: f32[2,1,256], index: 6, kind: input, shape index: {}]
  %s7 = inlined_call_operand.hbm [shape: bf16[2,256,128], index: 7, kind: input, shape index: {}]
  %s8 = inlined_call_operand.vmem [shape: f32[2,1,128], index: 8, kind: input, shape index: {}]
  %s9 = inlined_call_operand.vmem [shape: f32[2,1,128], index: 9, kind: input, shape index: {}]
  %s10 = inlined_call_operand.vmem [shape: f32[2,1,128], index: 10, kind: input, shape index: {}]
  %s11 = inlined_call_operand.vmem [shape: f32[2,1,128], index: 11, kind: input, shape index: {}]
  %s12 = inlined_call_operand.vmem [shape: f32[2,1,128], index: 12, kind: input, shape index: {}]
  %s13 = inlined_call_operand.hbm [shape: f32[16,128], index: 13, kind: output, shape index: {0}]
  %s14 = inlined_call_operand.hbm [shape: f32[2,8,8], index: 14, kind: output, shape index: {1}]
  %15 = xla_tuple %s13, %s14
  %s16 = sld [smem:[#allocation0]]
  $region133: #{tpu_custom_call.1} parent=0
    _
  %s18 = ssub.s32 1, %s16
  %s19 = scalar_select 0, %s18, %s16
  $region1: #{tpu_custom_call.1} parent=0
    #allocation5 [shape = 'u8[196608]{0}', space=vmem, size = 0x30000, scoped, tag = 'input window, operand 1']
    #allocation6 [shape = 's32[2]{0}', space=sflag, size = 0x8, scoped, tag = 'scoped memory for tpu_custom_call.1']
    #allocation7 [shape = 's32[2]{0}', space=sflag, size = 0x8, scoped, tag = 'scoped memory for tpu_custom_call.1']
    #allocation8 [shape = 'u8[65536]{0}', space=vmem, size = 0x10000, scoped, tag = 'input window, operand 3']
    #allocation9 [shape = 's32[2]{0}', space=sflag, size = 0x8, scoped, tag = 'scoped memory for tpu_custom_call.1']
    #allocation10 [shape = 'u8[131072]{0}', space=vmem, size = 0x20000, scoped, tag = 'input window, operand 5']
    #allocation11 [shape = 'u8[131072]{0}', space=vmem, size = 0x20000, scoped, tag = 'input window, operand 7']
    #allocation12 [shape = 's32[2]{0}', space=sflag, size = 0x8, scoped, tag = 'scoped memory for tpu_custom_call.1']
    #allocation13 [shape = 'u8[8192]{0}', space=vmem, size = 0x2000, scoped, tag = 'output window, operand 0']
    #allocation14 [shape = 'u8[8192]{0}', space=vmem, size = 0x2000, scoped, tag = 'output window, operand 1']
    #allocation15 [shape = 's32[2]{0}', space=sflag, size = 0x8, scoped, tag = 'scoped memory for tpu_custom_call.1']
    %20 = vsyncpa [#allocation6], 0
    %s21 = scalar_lea.sflag [#allocation6], 1
    %22 = vsyncpa %s21, 0
    %23 = vsyncpa [#allocation9], 0
    %s24 = scalar_lea.sflag [#allocation9], 1
    %25 = vsyncpa %s24, 0
    %26 = vsyncpa [#allocation12], 0
    %s27 = scalar_lea.sflag [#allocation12], 1
    %28 = vsyncpa %s27, 0
    %29 = vsyncpa [#allocation7], 0
    %s30 = scalar_lea.sflag [#allocation7], 1
    %31 = vsyncpa %s30, 0
    %32 = vsyncpa [#allocation15], 0
    %s33 = scalar_lea.sflag [#allocation15], 1
    %34 = vsyncpa %s33, 0
    loop: start=0, step=1, limit=6
    $region2: #{tpu_custom_call.1} parent=1 // loop_pre_header
      _
    $region3: #{tpu_custom_call.1} parent=1 // loop_header
      %s36 = sphi 0, %s40
      %p37 = scmp.ge.s32.totalorder %s36, 6
      %s43 = sphi 0, %s55
      %s44 = sphi 0, %s51
      %s45 = sphi 0, %s43
      %s46 = sphi 0, %s44
      %s47 = sphi 0, %s45
      %s48 = sphi 0, %s46
      %s58 = sphi 0, %s60
      %s61 = sphi 0, %s58
      %s62 = sphi 0, %s61
      %s78 = sphi 0, %s62
      %s84 = sphi 0, %s86
      %s87 = sphi 0, %s84
      %s88 = sphi 0, %s87
      %s104 = sphi 0, %s88
      %s110 = sphi 0, %s112
      %s113 = sphi 0, %s110
      %s114 = sphi 0, %s113
      %s130 = sphi 0, %s114
      %s136 = sphi 0, %s138
      %s139 = sphi 0, %s136
      %s140 = sphi 0, %s139
      %s156 = sphi 0, %s140
      %s162 = sphi 0, %s164
      %s165 = sphi 0, %s162
      %s166 = sphi 0, %s165
      %s182 = sphi 0, %s166
      %s188 = sphi 0, %s190
      %s191 = sphi 0, %s188
      %s192 = sphi 0, %s191
      %s208 = sphi 0, %s192
      %s214 = sphi 0, %s216
      %s217 = sphi 0, %s214
      %s218 = sphi 0, %s217
      %s234 = sphi 0, %s218
      %s240 = sphi 0, %s242
      %s243 = sphi 0, %s240
      %s244 = sphi 0, %s243
      %s260 = sphi 0, %s244
      %s266 = sphi 0, %s268
      %s269 = sphi 0, %s266
      %s270 = sphi 0, %s269
      %s286 = sphi 0, %s270
      %s292 = sphi 0, %s294
      %s295 = sphi 0, %s292
      %s296 = sphi 0, %s295
      %s312 = sphi 0, %s296
      %s318 = sphi 0, %s320
      %s321 = sphi 0, %s318
      %s322 = sphi 0, %s321
      %s338 = sphi 0, %s322
      %s344 = sphi 0, %s346
      %s347 = sphi 0, %s344
      %s348 = sphi 0, %s347
      %s364 = sphi 0, %s348
      %s370 = sphi 0, %s372
      %s373 = sphi 0, %s370
      %s374 = sphi 0, %s373
      %s390 = sphi 0, %s374
      %s396 = sphi 0, %s398
      %s399 = sphi 0, %s396
      %s400 = sphi 0, %s399
      %s416 = sphi 0, %s400
    $region4: #{tpu_custom_call.1} parent=1 // loop_header_branch
      %39 = sbr.rel (%p37) target = $region8
    $region5: #{tpu_custom_call.1} parent=1 // loop_body
      %s41 = ssub.s32 %s36, 1
      %s42 = ssub.s32 %s36, 2
      %s49 = sadd.s32 1, %s44
      %p50 = scmp.ge.s32.totalorder %s49, 2
      %s51 = scalar_select %p50, 0, %s49
      %s52 = sadd.s32 1, %s43
      %s53 = scalar_select %p50, %s52, %s43
      %p54 = scmp.ge.s32.totalorder %s53, 2
      %s55 = scalar_select %p54, 0, %s53
      %s56 = ssub.s32 %s44, %s51
      %p57 = scmp.eq.s32.totalorder %s56, 0
      %s59 = sadd.s32 %s58, 1
      %s60 = scalar_select %p57, %s58, %s59
      %p63 = pneg %p57
      %p64 = scmp.eq.s32.totalorder %s36, 3
      %p65 = por %p63, %p64
      %p66 = scmp.ne.s32.totalorder %s58, %s61
      %p67 = scmp.eq.s32.totalorder %s36, 0
      %p68 = por %p66, %p67
      %p69 = scmp.ne.s32.totalorder %s58, %s61
      %p70 = scmp.eq.s32.totalorder %s41, 3
      %p71 = por %p69, %p70
      %p72 = scmp.ne.s32.totalorder %s61, %s62
      %p73 = scmp.eq.s32.totalorder %s41, 0
      %p74 = por %p72, %p73
      %p75 = scmp.ne.s32.totalorder %s61, %s62
      %p76 = scmp.eq.s32.totalorder %s42, 3
      %p77 = por %p75, %p76
      %p79 = scmp.ne.s32.totalorder %s62, %s78
      %p80 = scmp.eq.s32.totalorder %s42, 0
      %p81 = por %p79, %p80
      %s82 = ssub.s32 %s44, %s51
      %p83 = scmp.eq.s32.totalorder %s82, 0
      %s85 = sadd.s32 %s84, 1
      %s86 = scalar_select %p83, %s84, %s85
      %p89 = pneg %p83
      %p90 = scmp.eq.s32.totalorder %s36, 3
      %p91 = por %p89, %p90
      %p92 = scmp.ne.s32.totalorder %s84, %s87
      %p93 = scmp.eq.s32.totalorder %s36, 0
      %p94 = por %p92, %p93
      %p95 = scmp.ne.s32.totalorder %s84, %s87
      %p96 = scmp.eq.s32.totalorder %s41, 3
      %p97 = por %p95, %p96
      %p98 = scmp.ne.s32.totalorder %s87, %s88
      %p99 = scmp.eq.s32.totalorder %s41, 0
      %p100 = por %p98, %p99
      %p101 = scmp.ne.s32.totalorder %s87, %s88
      %p102 = scmp.eq.s32.totalorder %s42, 3
      %p103 = por %p101, %p102
      %p105 = scmp.ne.s32.totalorder %s88, %s104
      %p106 = scmp.eq.s32.totalorder %s42, 0
      %p107 = por %p105, %p106
      %s108 = ssub.s32 %s44, %s51
      %p109 = scmp.eq.s32.totalorder %s108, 0
      %s111 = sadd.s32 %s110, 1
      %s112 = scalar_select %p109, %s110, %s111
      %p115 = pneg %p109
      %p116 = scmp.eq.s32.totalorder %s36, 3
      %p117 = por %p115, %p116
      %p118 = scmp.ne.s32.totalorder %s110, %s113
      %p119 = scmp.eq.s32.totalorder %s36, 0
      %p120 = por %p118, %p119
      %p121 = scmp.ne.s32.totalorder %s110, %s113
      %p122 = scmp.eq.s32.totalorder %s41, 3
      %p123 = por %p121, %p122
      %p124 = scmp.ne.s32.totalorder %s113, %s114
      %p125 = scmp.eq.s32.totalorder %s41, 0
      %p126 = por %p124, %p125
      %p127 = scmp.ne.s32.totalorder %s113, %s114
      %p128 = scmp.eq.s32.totalorder %s42, 3
      %p129 = por %p127, %p128
      %p131 = scmp.ne.s32.totalorder %s114, %s130
      %p132 = scmp.eq.s32.totalorder %s42, 0
      %p133 = por %p131, %p132
      %s134 = ssub.s32 %s44, %s51
      %p135 = scmp.eq.s32.totalorder %s134, 0
      %s137 = sadd.s32 %s136, 1
      %s138 = scalar_select %p135, %s136, %s137
      %p141 = pneg %p135
      %p142 = scmp.eq.s32.totalorder %s36, 3
      %p143 = por %p141, %p142
      %p144 = scmp.ne.s32.totalorder %s136, %s139
      %p145 = scmp.eq.s32.totalorder %s36, 0
      %p146 = por %p144, %p145
      %p147 = scmp.ne.s32.totalorder %s136, %s139
      %p148 = scmp.eq.s32.totalorder %s41, 3
      %p149 = por %p147, %p148
      %p150 = scmp.ne.s32.totalorder %s139, %s140
      %p151 = scmp.eq.s32.totalorder %s41, 0
      %p152 = por %p150, %p151
      %p153 = scmp.ne.s32.totalorder %s139, %s140
      %p154 = scmp.eq.s32.totalorder %s42, 3
      %p155 = por %p153, %p154
      %p157 = scmp.ne.s32.totalorder %s140, %s156
      %p158 = scmp.eq.s32.totalorder %s42, 0
      %p159 = por %p157, %p158
      %s160 = ssub.s32 %s44, %s51
      %p161 = scmp.eq.s32.totalorder %s160, 0
      %s163 = sadd.s32 %s162, 1
      %s164 = scalar_select %p161, %s162, %s163
      %p167 = pneg %p161
      %p168 = scmp.eq.s32.totalorder %s36, 3
      %p169 = por %p167, %p168
      %p170 = scmp.ne.s32.totalorder %s162, %s165
      %p171 = scmp.eq.s32.totalorder %s36, 0
      %p172 = por %p170, %p171
      %p173 = scmp.ne.s32.totalorder %s162, %s165
      %p174 = scmp.eq.s32.totalorder %s41, 3
      %p175 = por %p173, %p174
      %p176 = scmp.ne.s32.totalorder %s165, %s166
      %p177 = scmp.eq.s32.totalorder %s41, 0
      %p178 = por %p176, %p177
      %p179 = scmp.ne.s32.totalorder %s165, %s166
      %p180 = scmp.eq.s32.totalorder %s42, 3
      %p181 = por %p179, %p180
      %p183 = scmp.ne.s32.totalorder %s166, %s182
      %p184 = scmp.eq.s32.totalorder %s42, 0
      %p185 = por %p183, %p184
      %s186 = ssub.s32 %s44, %s51
      %p187 = scmp.eq.s32.totalorder %s186, 0
      %s189 = sadd.s32 %s188, 1
      %s190 = scalar_select %p187, %s188, %s189
      %p193 = pneg %p187
      %p194 = scmp.eq.s32.totalorder %s36, 3
      %p195 = por %p193, %p194
      %p196 = scmp.ne.s32.totalorder %s188, %s191
      %p197 = scmp.eq.s32.totalorder %s36, 0
      %p198 = por %p196, %p197
      %p199 = scmp.ne.s32.totalorder %s188, %s191
      %p200 = scmp.eq.s32.totalorder %s41, 3
      %p201 = por %p199, %p200
      %p202 = scmp.ne.s32.totalorder %s191, %s192
      %p203 = scmp.eq.s32.totalorder %s41, 0
      %p204 = por %p202, %p203
      %p205 = scmp.ne.s32.totalorder %s191, %s192
      %p206 = scmp.eq.s32.totalorder %s42, 3
      %p207 = por %p205, %p206
      %p209 = scmp.ne.s32.totalorder %s192, %s208
      %p210 = scmp.eq.s32.totalorder %s42, 0
      %p211 = por %p209, %p210
      %s212 = ssub.s32 %s44, %s51
      %p213 = scmp.eq.s32.totalorder %s212, 0
      %s215 = sadd.s32 %s214, 1
      %s216 = scalar_select %p213, %s214, %s215
      %p219 = pneg %p213
      %p220 = scmp.eq.s32.totalorder %s36, 3
      %p221 = por %p219, %p220
      %p222 = scmp.ne.s32.totalorder %s214, %s217
      %p223 = scmp.eq.s32.totalorder %s36, 0
      %p224 = por %p222, %p223
      %p225 = scmp.ne.s32.totalorder %s214, %s217
      %p226 = scmp.eq.s32.totalorder %s41, 3
      %p227 = por %p225, %p226
      %p228 = scmp.ne.s32.totalorder %s217, %s218
      %p229 = scmp.eq.s32.totalorder %s41, 0
      %p230 = por %p228, %p229
      %p231 = scmp.ne.s32.totalorder %s217, %s218
      %p232 = scmp.eq.s32.totalorder %s42, 3
      %p233 = por %p231, %p232
      %p235 = scmp.ne.s32.totalorder %s218, %s234
      %p236 = scmp.eq.s32.totalorder %s42, 0
      %p237 = por %p235, %p236
      %s238 = ssub.s32 %s44, %s51
      %p239 = scmp.eq.s32.totalorder %s238, 0
      %s241 = sadd.s32 %s240, 1
      %s242 = scalar_select %p239, %s240, %s241
      %p245 = pneg %p239
      %p246 = scmp.eq.s32.totalorder %s36, 3
      %p247 = por %p245, %p246
      %p248 = scmp.ne.s32.totalorder %s240, %s243
      %p249 = scmp.eq.s32.totalorder %s36, 0
      %p250 = por %p248, %p249
      %p251 = scmp.ne.s32.totalorder %s240, %s243
      %p252 = scmp.eq.s32.totalorder %s41, 3
      %p253 = por %p251, %p252
      %p254 = scmp.ne.s32.totalorder %s243, %s244
      %p255 = scmp.eq.s32.totalorder %s41, 0
      %p256 = por %p254, %p255
      %p257 = scmp.ne.s32.totalorder %s243, %s244
      %p258 = scmp.eq.s32.totalorder %s42, 3
      %p259 = por %p257, %p258
      %p261 = scmp.ne.s32.totalorder %s244, %s260
      %p262 = scmp.eq.s32.totalorder %s42, 0
      %p263 = por %p261, %p262
      %s264 = ssub.s32 %s44, %s51
      %p265 = scmp.eq.s32.totalorder %s264, 0
      %s267 = sadd.s32 %s266, 1
      %s268 = scalar_select %p265, %s266, %s267
      %p271 = pneg %p265
      %p272 = scmp.eq.s32.totalorder %s36, 3
      %p273 = por %p271, %p272
      %p274 = scmp.ne.s32.totalorder %s266, %s269
      %p275 = scmp.eq.s32.totalorder %s36, 0
      %p276 = por %p274, %p275
      %p277 = scmp.ne.s32.totalorder %s266, %s269
      %p278 = scmp.eq.s32.totalorder %s41, 3
      %p279 = por %p277, %p278
      %p280 = scmp.ne.s32.totalorder %s269, %s270
      %p281 = scmp.eq.s32.totalorder %s41, 0
      %p282 = por %p280, %p281
      %p283 = scmp.ne.s32.totalorder %s269, %s270
      %p284 = scmp.eq.s32.totalorder %s42, 3
      %p285 = por %p283, %p284
      %p287 = scmp.ne.s32.totalorder %s270, %s286
      %p288 = scmp.eq.s32.totalorder %s42, 0
      %p289 = por %p287, %p288
      %s290 = ssub.s32 %s44, %s51
      %p291 = scmp.eq.s32.totalorder %s290, 0
      %s293 = sadd.s32 %s292, 1
      %s294 = scalar_select %p291, %s292, %s293
      %p297 = pneg %p291
      %p298 = scmp.eq.s32.totalorder %s36, 3
      %p299 = por %p297, %p298
      %p300 = scmp.ne.s32.totalorder %s292, %s295
      %p301 = scmp.eq.s32.totalorder %s36, 0
      %p302 = por %p300, %p301
      %p303 = scmp.ne.s32.totalorder %s292, %s295
      %p304 = scmp.eq.s32.totalorder %s41, 3
      %p305 = por %p303, %p304
      %p306 = scmp.ne.s32.totalorder %s295, %s296
      %p307 = scmp.eq.s32.totalorder %s41, 0
      %p308 = por %p306, %p307
      %p309 = scmp.ne.s32.totalorder %s295, %s296
      %p310 = scmp.eq.s32.totalorder %s42, 3
      %p311 = por %p309, %p310
      %p313 = scmp.ne.s32.totalorder %s296, %s312
      %p314 = scmp.eq.s32.totalorder %s42, 0
      %p315 = por %p313, %p314
      %s316 = ssub.s32 %s44, %s51
      %p317 = scmp.eq.s32.totalorder %s316, 0
      %s319 = sadd.s32 %s318, 1
      %s320 = scalar_select %p317, %s318, %s319
      %p323 = pneg %p317
      %p324 = scmp.eq.s32.totalorder %s36, 3
      %p325 = por %p323, %p324
      %p326 = scmp.ne.s32.totalorder %s318, %s321
      %p327 = scmp.eq.s32.totalorder %s36, 0
      %p328 = por %p326, %p327
      %p329 = scmp.ne.s32.totalorder %s318, %s321
      %p330 = scmp.eq.s32.totalorder %s41, 3
      %p331 = por %p329, %p330
      %p332 = scmp.ne.s32.totalorder %s321, %s322
      %p333 = scmp.eq.s32.totalorder %s41, 0
      %p334 = por %p332, %p333
      %p335 = scmp.ne.s32.totalorder %s321, %s322
      %p336 = scmp.eq.s32.totalorder %s42, 3
      %p337 = por %p335, %p336
      %p339 = scmp.ne.s32.totalorder %s322, %s338
      %p340 = scmp.eq.s32.totalorder %s42, 0
      %p341 = por %p339, %p340
      %s342 = ssub.s32 %s44, %s51
      %p343 = scmp.eq.s32.totalorder %s342, 0
      %s345 = sadd.s32 %s344, 1
      %s346 = scalar_select %p343, %s344, %s345
      %p349 = pneg %p343
      %p350 = scmp.eq.s32.totalorder %s36, 3
      %p351 = por %p349, %p350
      %p352 = scmp.ne.s32.totalorder %s344, %s347
      %p353 = scmp.eq.s32.totalorder %s36, 0
      %p354 = por %p352, %p353
      %p355 = scmp.ne.s32.totalorder %s344, %s347
      %p356 = scmp.eq.s32.totalorder %s41, 3
      %p357 = por %p355, %p356
      %p358 = scmp.ne.s32.totalorder %s347, %s348
      %p359 = scmp.eq.s32.totalorder %s41, 0
      %p360 = por %p358, %p359
      %p361 = scmp.ne.s32.totalorder %s347, %s348
      %p362 = scmp.eq.s32.totalorder %s42, 3
      %p363 = por %p361, %p362
      %p365 = scmp.ne.s32.totalorder %s348, %s364
      %p366 = scmp.eq.s32.totalorder %s42, 0
      %p367 = por %p365, %p366
      %s368 = ssub.s32 %s43, %s55
      %p369 = scmp.eq.s32.totalorder %s368, 0
      %s371 = sadd.s32 %s370, 1
      %s372 = scalar_select %p369, %s370, %s371
      %p375 = pneg %p369
      %p376 = scmp.eq.s32.totalorder %s36, 3
      %p377 = por %p375, %p376
      %p378 = scmp.ne.s32.totalorder %s370, %s373
      %p379 = scmp.eq.s32.totalorder %s36, 0
      %p380 = por %p378, %p379
      %p381 = scmp.ne.s32.totalorder %s370, %s373
      %p382 = scmp.eq.s32.totalorder %s41, 3
      %p383 = por %p381, %p382
      %p384 = scmp.ne.s32.totalorder %s373, %s374
      %p385 = scmp.eq.s32.totalorder %s41, 0
      %p386 = por %p384, %p385
      %p387 = scmp.ne.s32.totalorder %s373, %s374
      %p388 = scmp.eq.s32.totalorder %s42, 3
      %p389 = por %p387, %p388
      %p391 = scmp.ne.s32.totalorder %s374, %s390
      %p392 = scmp.eq.s32.totalorder %s42, 0
      %p393 = por %p391, %p392
      %s394 = ssub.s32 %s43, %s55
      %p395 = scmp.eq.s32.totalorder %s394, 0
      %s397 = sadd.s32 %s396, 1
      %s398 = scalar_select %p395, %s396, %s397
      %p401 = pneg %p395
      %p402 = scmp.eq.s32.totalorder %s36, 3
      %p403 = por %p401, %p402
      %p404 = scmp.ne.s32.totalorder %s396, %s399
      %p405 = scmp.eq.s32.totalorder %s36, 0
      %p406 = por %p404, %p405
      %p407 = scmp.ne.s32.totalorder %s396, %s399
      %p408 = scmp.eq.s32.totalorder %s41, 3
      %p409 = por %p407, %p408
      %p410 = scmp.ne.s32.totalorder %s399, %s400
      %p411 = scmp.eq.s32.totalorder %s41, 0
      %p412 = por %p410, %p411
      %p413 = scmp.ne.s32.totalorder %s399, %s400
      %p414 = scmp.eq.s32.totalorder %s42, 3
      %p415 = por %p413, %p414
      %p417 = scmp.ne.s32.totalorder %s400, %s416
      %p418 = scmp.eq.s32.totalorder %s42, 0
      %p419 = por %p417, %p418
      %p420 = scmp.le.s32.totalorder 1, %s36
      %p421 = scmp.lt.s32.totalorder %s36, 5
      %p422 = pnand %p420, %p421
      %p423 = pneg %p422
      // Predicated region
      $region9: #{tpu_custom_call.1} parent=5 // pred_check
        _
      $region10: #{tpu_custom_call.1} parent=5 // pred_check_branch
        %425 = sbr.rel (%p422) target = $region12
      $region11: #{tpu_custom_call.1} parent=5 // pred_region
        %s426 = ssub.s32 %s36, 1
      $region12: #{tpu_custom_call.1} parent=5 // pred_fallthru
        _
      %p427 = scmp.lt.s32.totalorder %s36, 4
      // Predicated region
      $region13: #{tpu_custom_call.1} parent=5 // pred_check
        %p428 = pneg %p427
      $region14: #{tpu_custom_call.1} parent=5 // pred_check_branch
        %430 = sbr.rel (%p428) target = $region16
      $region15: #{tpu_custom_call.1} parent=5 // pred_region
        // Predicated region
        $region17: #{tpu_custom_call.1} parent=15 // pred_check
          %p431 = pneg %p68
        $region18: #{tpu_custom_call.1} parent=15 // pred_check_branch
          %433 = sbr.rel (%p431) target = $region20
        $region19: #{tpu_custom_call.1} parent=15 // pred_region
          %s434 = sand.u32 %s58, 1
          %s435 = scalar_lea.sflag [#allocation6], %s434
          %s436 = sand.u32 %s58, 1
          %s437 = smul.addr %s436, 192
          %s438 = scalar_lea.vmem [#allocation5], %s437
          %s440 = ssub.s32 3072, 3072
          %441 = vsyncadd %s435, %s440
          %s442 = smul.addr %s44, 48
          %s443 = smul.addr %s442, 64
          %s444 = scalar_lea.hbm %s1, %s443
          %s445 = sshll.u32 %s438, 4
          %s446 = int_to_ptr.vmem [resolvable:$true] %s445
          %451 = dma.hbm_to_vmem [thread:$0]  %s444, 3072, %s446, %s435, 192, 192, 12
        $region20: #{tpu_custom_call.1} parent=15 // pred_fallthru
          _
        // Predicated region
        $region21: #{tpu_custom_call.1} parent=15 // pred_check
          %p452 = pneg %p94
        $region22: #{tpu_custom_call.1} parent=15 // pred_check_branch
          %454 = sbr.rel (%p452) target = $region24
        $region23: #{tpu_custom_call.1} parent=15 // pred_region
          %p455 = scmp.lt.s32.totalorder %s44, 1
          %s456 = scalar_select %p455, %s44, 1
          %s457 = smul.addr %s456, 3
          %s458 = scalar_lea.vmem %s2, %s457
        $region24: #{tpu_custom_call.1} parent=15 // pred_fallthru
          _
        // Predicated region
        $region25: #{tpu_custom_call.1} parent=15 // pred_check
          %p459 = pneg %p120
        $region26: #{tpu_custom_call.1} parent=15 // pred_check_branch
          %461 = sbr.rel (%p459) target = $region28
        $region27: #{tpu_custom_call.1} parent=15 // pred_region
          %s462 = sand.u32 %s36, 1
          %s463 = scalar_lea.sflag [#allocation9], %s462
          %s464 = sand.u32 %s110, 1
          %s465 = smul.addr %s464, 64
          %s466 = scalar_lea.vmem [#allocation8], %s465
          %s468 = ssub.s32 1024, 1024
          %469 = vsyncadd %s463, %s468
          %s470 = smul.addr %s44, 16
          %s471 = smul.addr %s470, 64
          %s472 = scalar_lea.hbm %s3, %s471
          %s473 = sshll.u32 %s466, 4
          %s474 = int_to_ptr.vmem [resolvable:$true] %s473
          %479 = dma.hbm_to_vmem [thread:$0]  %s472, 1024, %s474, %s463, 64, 64, 4
        $region28: #{tpu_custom_call.1} parent=15 // pred_fallthru
          _
        // Predicated region
        $region29: #{tpu_custom_call.1} parent=15 // pred_check
          %p480 = pneg %p146
        $region30: #{tpu_custom_call.1} parent=15 // pred_check_branch
          %482 = sbr.rel (%p480) target = $region32
        $region31: #{tpu_custom_call.1} parent=15 // pred_region
          %p483 = scmp.lt.s32.totalorder %s44, 1
          %s484 = scalar_select %p483, %s44, 1
          %s485 = scalar_lea.vmem %s4, %s484
        $region32: #{tpu_custom_call.1} parent=15 // pred_fallthru
          _
        // Predicated region
        $region33: #{tpu_custom_call.1} parent=15 // pred_check
          %p486 = pneg %p172
        $region34: #{tpu_custom_call.1} parent=15 // pred_check_branch
          %488 = sbr.rel (%p486) target = $region36
        $region35: #{tpu_custom_call.1} parent=15 // pred_region
          %s489 = sand.u32 %s36, 1
          %s490 = scalar_lea.sflag [#allocation9], %s489
          %s491 = sand.u32 %s162, 1
          %s492 = smul.addr %s491, 128
          %s493 = scalar_lea.vmem [#allocation10], %s492
          %s495 = ssub.s32 2048, 2048
          %496 = vsyncadd %s490, %s495
          %s497 = smul.addr %s44, 32
          %s498 = smul.addr %s497, 64
          %s499 = scalar_lea.hbm %s5, %s498
          %s500 = sshll.u32 %s493, 4
          %s501 = int_to_ptr.vmem [resolvable:$true] %s500
          %506 = dma.hbm_to_vmem [thread:$0]  %s499, 2048, %s501, %s490, 128, 128, 8
        $region36: #{tpu_custom_call.1} parent=15 // pred_fallthru
          _
        // Predicated region
        $region37: #{tpu_custom_call.1} parent=15 // pred_check
          %p507 = pneg %p198
        $region38: #{tpu_custom_call.1} parent=15 // pred_check_branch
          %509 = sbr.rel (%p507) target = $region40
        $region39: #{tpu_custom_call.1} parent=15 // pred_region
          %p510 = scmp.lt.s32.totalorder %s44, 1
          %s511 = scalar_select %p510, %s44, 1
          %s512 = smul.addr %s511, 2
          %s513 = scalar_lea.vmem %s6, %s512
        $region40: #{tpu_custom_call.1} parent=15 // pred_fallthru
          _
        // Predicated region
        $region41: #{tpu_custom_call.1} parent=15 // pred_check
          %p514 = pneg %p224
        $region42: #{tpu_custom_call.1} parent=15 // pred_check_branch
          %516 = sbr.rel (%p514) target = $region44
        $region43: #{tpu_custom_call.1} parent=15 // pred_region
          %s517 = sand.u32 %s214, 1
          %s518 = scalar_lea.sflag [#allocation12], %s517
          %s519 = sand.u32 %s214, 1
          %s520 = smul.addr %s519, 128
          %s521 = scalar_lea.vmem [#allocation11], %s520
          %s523 = ssub.s32 2048, 2048
          %524 = vsyncadd %s518, %s523
          %s525 = smul.addr %s44, 32
          %s526 = smul.addr %s525, 64
          %s527 = scalar_lea.hbm %s7, %s526
          %s528 = sshll.u32 %s521, 4
          %s529 = int_to_ptr.vmem [resolvable:$true] %s528
          %534 = dma.hbm_to_vmem [thread:$0]  %s527, 2048, %s529, %s518, 64, 64, 4
        $region44: #{tpu_custom_call.1} parent=15 // pred_fallthru
          _
        // Predicated region
        $region45: #{tpu_custom_call.1} parent=15 // pred_check
          %p535 = pneg %p250
        $region46: #{tpu_custom_call.1} parent=15 // pred_check_branch
          %537 = sbr.rel (%p535) target = $region48
        $region47: #{tpu_custom_call.1} parent=15 // pred_region
          %p538 = scmp.lt.s32.totalorder %s44, 1
          %s539 = scalar_select %p538, %s44, 1
          %s540 = scalar_lea.vmem %s8, %s539
        $region48: #{tpu_custom_call.1} parent=15 // pred_fallthru
          _
        // Predicated region
        $region49: #{tpu_custom_call.1} parent=15 // pred_check
          %p541 = pneg %p276
        $region50: #{tpu_custom_call.1} parent=15 // pred_check_branch
          %543 = sbr.rel (%p541) target = $region52
        $region51: #{tpu_custom_call.1} parent=15 // pred_region
          %p544 = scmp.lt.s32.totalorder %s44, 1
          %s545 = scalar_select %p544, %s44, 1
          %s546 = scalar_lea.vmem %s9, %s545
        $region52: #{tpu_custom_call.1} parent=15 // pred_fallthru
          _
        // Predicated region
        $region53: #{tpu_custom_call.1} parent=15 // pred_check
          %p547 = pneg %p302
        $region54: #{tpu_custom_call.1} parent=15 // pred_check_branch
          %549 = sbr.rel (%p547) target = $region56
        $region55: #{tpu_custom_call.1} parent=15 // pred_region
          %p550 = scmp.lt.s32.totalorder %s44, 1
          %s551 = scalar_select %p550, %s44, 1
          %s552 = scalar_lea.vmem %s10, %s551
        $region56: #{tpu_custom_call.1} parent=15 // pred_fallthru
          _
        // Predicated region
        $region57: #{tpu_custom_call.1} parent=15 // pred_check
          %p553 = pneg %p328
        $region58: #{tpu_custom_call.1} parent=15 // pred_check_branch
          %555 = sbr.rel (%p553) target = $region60
        $region59: #{tpu_custom_call.1} parent=15 // pred_region
          %p556 = scmp.lt.s32.totalorder %s44, 1
          %s557 = scalar_select %p556, %s44, 1
          %s558 = scalar_lea.vmem %s11, %s557
        $region60: #{tpu_custom_call.1} parent=15 // pred_fallthru
          _
        // Predicated region
        $region61: #{tpu_custom_call.1} parent=15 // pred_check
          %p559 = pneg %p354
        $region62: #{tpu_custom_call.1} parent=15 // pred_check_branch
          %561 = sbr.rel (%p559) target = $region64
        $region63: #{tpu_custom_call.1} parent=15 // pred_region
          %p562 = scmp.lt.s32.totalorder %s44, 1
          %s563 = scalar_select %p562, %s44, 1
          %s564 = scalar_lea.vmem %s12, %s563
        $region64: #{tpu_custom_call.1} parent=15 // pred_fallthru
          _
      $region16: #{tpu_custom_call.1} parent=5 // pred_fallthru
        _
      %p565 = scmp.le.s32.totalorder 1, %s36
      %p566 = scmp.lt.s32.totalorder %s36, 5
      %p567 = pnand %p565, %p566
      %p568 = pneg %p567
      // Predicated region
      $region65: #{tpu_custom_call.1} parent=5 // pred_check
        _
      $region66: #{tpu_custom_call.1} parent=5 // pred_check_branch
        %570 = sbr.rel (%p567) target = $region68
      $region67: #{tpu_custom_call.1} parent=5 // pred_region
        %s571 = ssub.s32 %s36, 1
        %s572 = sand.u32 %s61, 1
        %s573 = scalar_lea.sflag [#allocation6], %s572
        %s574 = sand.u32 %s61, 1
        %s575 = smul.addr %s574, 192
        %s576 = scalar_lea.vmem [#allocation5], %s575
        // Predicated region
        $region69: #{tpu_custom_call.1} parent=67 // pred_check
          %p577 = pneg %p74
        $region70: #{tpu_custom_call.1} parent=67 // pred_check_branch
          %579 = sbr.rel (%p577) target = $region72
        $region71: #{tpu_custom_call.1} parent=67 // pred_region
          %580 = dma.done %s573, 3072
        $region72: #{tpu_custom_call.1} parent=67 // pred_fallthru
          _
        %s581 = sand.u32 %s41, 1
        %s582 = scalar_lea.sflag [#allocation9], %s581
        %s583 = sand.u32 %s113, 1
        %s584 = smul.addr %s583, 64
        %s585 = scalar_lea.vmem [#allocation8], %s584
        // Predicated region
        $region73: #{tpu_custom_call.1} parent=67 // pred_check
          %p586 = pneg %p126
        $region74: #{tpu_custom_call.1} parent=67 // pred_check_branch
          %588 = sbr.rel (%p586) target = $region76
        $region75: #{tpu_custom_call.1} parent=67 // pred_region
          %589 = dma.done %s582, 1024
        $region76: #{tpu_custom_call.1} parent=67 // pred_fallthru
          _
        %s590 = sand.u32 %s41, 1
        %s591 = scalar_lea.sflag [#allocation9], %s590
        %s592 = sand.u32 %s165, 1
        %s593 = smul.addr %s592, 128
        %s594 = scalar_lea.vmem [#allocation10], %s593
        // Predicated region
        $region77: #{tpu_custom_call.1} parent=67 // pred_check
          %p595 = pneg %p178
        $region78: #{tpu_custom_call.1} parent=67 // pred_check_branch
          %597 = sbr.rel (%p595) target = $region80
        $region79: #{tpu_custom_call.1} parent=67 // pred_region
          %598 = dma.done %s591, 2048
        $region80: #{tpu_custom_call.1} parent=67 // pred_fallthru
          _
        %s599 = sand.u32 %s217, 1
        %s600 = scalar_lea.sflag [#allocation12], %s599
        %s601 = sand.u32 %s217, 1
        %s602 = smul.addr %s601, 128
        %s603 = scalar_lea.vmem [#allocation11], %s602
        // Predicated region
        $region81: #{tpu_custom_call.1} parent=67 // pred_check
          %p604 = pneg %p230
        $region82: #{tpu_custom_call.1} parent=67 // pred_check_branch
          %606 = sbr.rel (%p604) target = $region84
        $region83: #{tpu_custom_call.1} parent=67 // pred_region
          %607 = dma.done %s600, 2048
        $region84: #{tpu_custom_call.1} parent=67 // pred_fallthru
          _
        %s608 = sand.u32 %s61, 1
        %s609 = scalar_lea.sflag [#allocation6], %s608
        %s610 = sand.u32 %s61, 1
        %s611 = smul.addr %s610, 192
        %s612 = scalar_lea.vmem [#allocation5], %s611
        %p613 = pneg %p74
        %p614 = pneg %p71
        %p615 = scmp.lt.s32.totalorder %s46, 1
        %s616 = scalar_select %p615, %s46, 1
        %s617 = smul.addr %s616, 3
        %s618 = scalar_lea.vmem %s2, %s617
        %p619 = pneg %p100
        %p620 = pneg %p97
        %s621 = sand.u32 %s41, 1
        %s622 = scalar_lea.sflag [#allocation9], %s621
        %s623 = sand.u32 %s113, 1
        %s624 = smul.addr %s623, 64
        %s625 = scalar_lea.vmem [#allocation8], %s624
        %p626 = pneg %p126
        %p627 = pneg %p123
        %p628 = scmp.lt.s32.totalorder %s46, 1
        %s629 = scalar_select %p628, %s46, 1
        %s630 = scalar_lea.vmem %s4, %s629
        %p631 = pneg %p152
        %p632 = pneg %p149
        %s633 = sand.u32 %s41, 1
        %s634 = scalar_lea.sflag [#allocation9], %s633
        %s635 = sand.u32 %s165, 1
        %s636 = smul.addr %s635, 128
        %s637 = scalar_lea.vmem [#allocation10], %s636
        %p638 = pneg %p178
        %p639 = pneg %p175
        %p640 = scmp.lt.s32.totalorder %s46, 1
        %s641 = scalar_select %p640, %s46, 1
        %s642 = smul.addr %s641, 2
        %s643 = scalar_lea.vmem %s6, %s642
        %p644 = pneg %p204
        %p645 = pneg %p201
        %s646 = sand.u32 %s217, 1
        %s647 = scalar_lea.sflag [#allocation12], %s646
        %s648 = sand.u32 %s217, 1
        %s649 = smul.addr %s648, 128
        %s650 = scalar_lea.vmem [#allocation11], %s649
        %p651 = pneg %p230
        %p652 = pneg %p227
        %p653 = scmp.lt.s32.totalorder %s46, 1
        %s654 = scalar_select %p653, %s46, 1
        %s655 = scalar_lea.vmem %s8, %s654
        %p656 = pneg %p256
        %p657 = pneg %p253
        %p658 = scmp.lt.s32.totalorder %s46, 1
        %s659 = scalar_select %p658, %s46, 1
        %s660 = scalar_lea.vmem %s9, %s659
        %p661 = pneg %p282
        %p662 = pneg %p279
        %p663 = scmp.lt.s32.totalorder %s46, 1
        %s664 = scalar_select %p663, %s46, 1
        %s665 = scalar_lea.vmem %s10, %s664
        %p666 = pneg %p308
        %p667 = pneg %p305
        %p668 = scmp.lt.s32.totalorder %s46, 1
        %s669 = scalar_select %p668, %s46, 1
        %s670 = scalar_lea.vmem %s11, %s669
        %p671 = pneg %p334
        %p672 = pneg %p331
        %p673 = scmp.lt.s32.totalorder %s46, 1
        %s674 = scalar_select %p673, %s46, 1
        %s675 = scalar_lea.vmem %s12, %s674
        %p676 = pneg %p360
        %p677 = pneg %p357
        %p678 = pneg %p386
        %p679 = pneg %p383
        %s680 = sand.u32 %s373, 1
        %s681 = scalar_lea.sflag [#allocation7], %s680
        %s682 = sand.u32 %s373, 1
        %s683 = smul.addr %s682, 8
        %s684 = scalar_lea.vmem [#allocation13], %s683
        %p685 = pneg %p412
        %p686 = pneg %p409
        %s687 = sand.u32 %s399, 1
        %s688 = scalar_lea.sflag [#allocation15], %s687
        %s689 = sand.u32 %s399, 1
        %s690 = smul.addr %s689, 8
        %s691 = scalar_lea.vmem [#allocation14], %s690
        %p692 = scmp.lt.s32.totalorder %s46, 1
        %s693 = scalar_select %p692, %s46, 1
        %s694 = smul.addr %s693, 3
        %s695 = scalar_lea.vmem %s2, %s694
        %p696 = scmp.lt.s32.totalorder %s46, 1
        %s697 = scalar_select %p696, %s46, 1
        %s698 = scalar_lea.vmem %s4, %s697
        %p699 = scmp.lt.s32.totalorder %s46, 1
        %s700 = scalar_select %p699, %s46, 1
        %s701 = smul.addr %s700, 2
        %s702 = scalar_lea.vmem %s6, %s701
        %p703 = scmp.lt.s32.totalorder %s46, 1
        %s704 = scalar_select %p703, %s46, 1
        %s705 = scalar_lea.vmem %s8, %s704
        %p706 = scmp.lt.s32.totalorder %s46, 1
        %s707 = scalar_select %p706, %s46, 1
        %s708 = scalar_lea.vmem %s9, %s707
        %p709 = scmp.lt.s32.totalorder %s46, 1
        %s710 = scalar_select %p709, %s46, 1
        %s711 = scalar_lea.vmem %s10, %s710
        %p712 = scmp.lt.s32.totalorder %s46, 1
        %s713 = scalar_select %p712, %s46, 1
        %s714 = scalar_lea.vmem %s11, %s713
        %p715 = scmp.lt.s32.totalorder %s46, 1
        %s716 = scalar_select %p715, %s46, 1
        %s717 = scalar_lea.vmem %s12, %s716
        %p719 = scmp.eq.s32.totalorder %s46, 0
        // Predicated region
        $region85: #{tpu_custom_call.1} parent=67 // pred_check
          %p720 = pneg %p719
        $region86: #{tpu_custom_call.1} parent=67 // pred_check_branch
          %722 = sbr.rel (%p720) target = $region88
        $region87: #{tpu_custom_call.1} parent=67 // pred_region
          %s723 = smul.u32 %s45, 8
          %s724 = smul.addr %s723, 16
          %s725 = scalar_lea.hbm %s0, %s724
          // Predicated region
          $region89: #{tpu_custom_call.1} parent=87 // pred_check
            _
          $region90: #{tpu_custom_call.1} parent=87 // pred_check_branch
            %727 = sbr.rel target = $region92
          $region91: #{tpu_custom_call.1} parent=87 // pred_region
            %728 = sst [smem:[#allocation18]] [#allocation17]
            %729 = sst [smem:[#allocation19]] [#allocation16]
          $region92: #{tpu_custom_call.1} parent=87 // pred_fallthru
            _
          %731 = shalt.err (0)
          %s733 = sshll.u32 [#allocation2], 4
          %s734 = int_to_ptr.vmem [resolvable:$true] %s733
          %736 = dma.hbm_to_vmem [thread:$0]  %s725, 128, %s734, [#allocation4]
          %s737 = smul.u32 8, 1
          %s738 = sshll.u32 %s737, 4
          %739 = dma.done [#allocation4], %s738
        $region88: #{tpu_custom_call.1} parent=67 // pred_fallthru
          _
        %v740 = vld [vmem:[#allocation2] sm:$0xff]
        %v741 = vpack.c.bf16 %v740, %v740
        %v742 = vld [vmem:[%s576] sm:$0xff]
        %v743 = vld [vmem:[%s576 + $0x8] sm:$0xf]
        %v744 = vld [vmem:[%s576 + $0xc] sm:$0xff]
        %v745 = vld [vmem:[%s576 + $0x14] sm:$0xf]
        %v746 = vld [vmem:[%s576 + $0x18] sm:$0xff]
        %v747 = vld [vmem:[%s576 + $0x20] sm:$0xf]
        %v748 = vld [vmem:[%s576 + $0x24] sm:$0xff]
        %v749 = vld [vmem:[%s576 + $0x2c] sm:$0xf]
        %v750 = vld [vmem:[%s576 + $0x30] sm:$0xff]
        %v751 = vld [vmem:[%s576 + $0x38] sm:$0xf]
        %v752 = vld [vmem:[%s576 + $0x3c] sm:$0xff]
        %v753 = vld [vmem:[%s576 + $0x44] sm:$0xf]
        %v754 = vld [vmem:[%s576 + $0x48] sm:$0xff]
        %v755 = vld [vmem:[%s576 + $0x50] sm:$0xf]
        %v756 = vld [vmem:[%s576 + $0x54] sm:$0xff]
        %v757 = vld [vmem:[%s576 + $0x5c] sm:$0xf]
        %v758 = vld [vmem:[%s576 + $0x60] sm:$0xff]
        %v759 = vld [vmem:[%s576 + $0x68] sm:$0xf]
        %v760 = vld [vmem:[%s576 + $0x6c] sm:$0xff]
        %v761 = vld [vmem:[%s576 + $0x74] sm:$0xf]
        %v762 = vld [vmem:[%s576 + $0x78] sm:$0xff]
        %v763 = vld [vmem:[%s576 + $0x80] sm:$0xf]
        %v764 = vld [vmem:[%s576 + $0x84] sm:$0xff]
        %v765 = vld [vmem:[%s576 + $0x8c] sm:$0xf]
        %v766 = vld [vmem:[%s576 + $0x90] sm:$0xff]
        %v767 = vld [vmem:[%s576 + $0x98] sm:$0xf]
        %v768 = vld [vmem:[%s576 + $0x9c] sm:$0xff]
        %v769 = vld [vmem:[%s576 + $0xa4] sm:$0xf]
        %v770 = vld [vmem:[%s576 + $0xa8] sm:$0xff]
        %v771 = vld [vmem:[%s576 + $0xb0] sm:$0xf]
        %v772 = vld [vmem:[%s576 + $0xb4] sm:$0xff]
        %v773 = vld [vmem:[%s576 + $0xbc] sm:$0xf]
        %v774 = vld [vmem:[%s695] sm:$0x7]
        %v776 = vlaneseq
        %v777 = vshrl.u32 %v776, 7
        %v778 = vsub.s32 0, %v777
        %v779 = vrot.slane %v774, %v778
        %v780 = vlaneseq
        %v781 = vshrl.u32 %v780, 7
        %v782 = vsub.s32 1, %v781
        %v783 = vrot.slane %v774, %v782
        %v784 = vlaneseq
        %v785 = vshrl.u32 %v784, 7
        %v786 = vsub.s32 2, %v785
        %v787 = vrot.slane %v774, %v786
        %v823 = vunpack.c.l.b16 %v742
        %v824 = vunpack.c.h.b16 %v742
        %v825 = vunpack.c.l.b16 %v743
        %v826 = vunpack.c.l.b16 %v744
        %v827 = vunpack.c.h.b16 %v744
        %v828 = vunpack.c.l.b16 %v745
        %v829 = vunpack.c.l.b16 %v746
        %v830 = vunpack.c.h.b16 %v746
        %v831 = vunpack.c.l.b16 %v747
        %v832 = vunpack.c.l.b16 %v748
        %v833 = vunpack.c.h.b16 %v748
        %v834 = vunpack.c.l.b16 %v749
        %v835 = vunpack.c.l.b16 %v750
        %v836 = vunpack.c.h.b16 %v750
        %v837 = vunpack.c.l.b16 %v751
        %v838 = vunpack.c.l.b16 %v752
        %v839 = vunpack.c.h.b16 %v752
        %v840 = vunpack.c.l.b16 %v753
        %v841 = vunpack.c.l.b16 %v754
        %v842 = vunpack.c.h.b16 %v754
        %v843 = vunpack.c.l.b16 %v755
        %v844 = vunpack.c.l.b16 %v756
        %v845 = vunpack.c.h.b16 %v756
        %v846 = vunpack.c.l.b16 %v757
        %v847 = vunpack.c.l.b16 %v758
        %v848 = vunpack.c.h.b16 %v758
        %v849 = vunpack.c.l.b16 %v759
        %v850 = vunpack.c.l.b16 %v760
        %v851 = vunpack.c.h.b16 %v760
        %v852 = vunpack.c.l.b16 %v761
        %v853 = vunpack.c.l.b16 %v762
        %v854 = vunpack.c.h.b16 %v762
        %v855 = vunpack.c.l.b16 %v763
        %v856 = vunpack.c.l.b16 %v764
        %v857 = vunpack.c.h.b16 %v764
        %v858 = vunpack.c.l.b16 %v765
        %v859 = vunpack.c.l.b16 %v766
        %v860 = vunpack.c.h.b16 %v766
        %v861 = vunpack.c.l.b16 %v767
        %v862 = vunpack.c.l.b16 %v768
        %v863 = vunpack.c.h.b16 %v768
        %v864 = vunpack.c.l.b16 %v769
        %v865 = vunpack.c.l.b16 %v770
        %v866 = vunpack.c.h.b16 %v770
        %v867 = vunpack.c.l.b16 %v771
        %v868 = vunpack.c.l.b16 %v772
        %v869 = vunpack.c.h.b16 %v772
        %v870 = vunpack.c.l.b16 %v773
        %v871 = vpack.c.b16 %v826, %v823
        %v872 = vpack.c.b16 %v827, %v824
        %v873 = vpack.c.b16 %v828, %v825
        %v874 = vpack.c.b16 %v832, %v829
        %v875 = vpack.c.b16 %v833, %v830
        %v876 = vpack.c.b16 %v834, %v831
        %v877 = vpack.c.b16 %v838, %v835
        %v878 = vpack.c.b16 %v839, %v836
        %v879 = vpack.c.b16 %v840, %v837
        %v880 = vpack.c.b16 %v844, %v841
        %v881 = vpack.c.b16 %v845, %v842
        %v882 = vpack.c.b16 %v846, %v843
        %v883 = vpack.c.b16 %v850, %v847
        %v884 = vpack.c.b16 %v851, %v848
        %v885 = vpack.c.b16 %v852, %v849
        %v886 = vpack.c.b16 %v856, %v853
        %v887 = vpack.c.b16 %v857, %v854
        %v888 = vpack.c.b16 %v858, %v855
        %v889 = vpack.c.b16 %v862, %v859
        %v890 = vpack.c.b16 %v863, %v860
        %v891 = vpack.c.b16 %v864, %v861
        %v892 = vpack.c.b16 %v868, %v865
        %v893 = vpack.c.b16 %v869, %v866
        %v894 = vpack.c.b16 %v870, %v867
        %919 = vmatprep.subr.bf16.mxu0 %v872
        %920 = vmatpush1.bf16.msra.mxu0 %v871
        %921 = vmatprep.subr.bf16.mxu0 %v875
        %922 = vmatpush1.bf16.msra.mxu0 %v874
        %923 = vmatprep.subr.bf16.mxu0 %v878
        %924 = vmatpush1.bf16.msra.mxu0 %v877
        %925 = vmatprep.subr.bf16.mxu0 %v881
        %926 = vmatpush1.bf16.msra.mxu0 %v880
        %927 = vmatprep.subr.bf16.mxu0 %v884
        %928 = vmatpush1.bf16.msra.mxu0 %v883
        %929 = vmatprep.subr.bf16.mxu0 %v887
        %930 = vmatpush1.bf16.msra.mxu0 %v886
        %931 = vmatprep.subr.bf16.mxu0 %v890
        %932 = vmatpush1.bf16.msra.mxu0 %v889
        %933 = vmatprep.subr.bf16.mxu0 %v893
        %934 = vmatpush1.bf16.msra.mxu0 %v892
        %935 = vmatprep.subr.bf16.mxu0 0
        %936 = vmatpush1.bf16.msra.mxu0 0
        %937 = vmatprep.subr.bf16.mxu0 0
        %938 = vmatpush1.bf16.msra.mxu0 0
        %939 = vmatprep.subr.bf16.mxu0 0
        %940 = vmatpush1.bf16.msra.mxu0 0
        %941 = vmatprep.subr.bf16.mxu0 0
        %942 = vmatpush1.bf16.msra.mxu0 0
        %943 = vmatprep.subr.bf16.mxu0 0
        %944 = vmatpush1.bf16.msra.mxu0 0
        %945 = vmatprep.subr.bf16.mxu0 0
        %946 = vmatpush1.bf16.msra.mxu0 0
        %947 = vmatprep.subr.bf16.mxu0 0
        %948 = vmatpush1.bf16.msra.mxu0 0
        %949 = vmatprep.subr.bf16.mxu0 0
        %950 = vmatpush1.bf16.msra.mxu0 0
        %951 = vmatprep.mubr.bf16.mxu0 0
        %952 = vmatmul.mubr.bf16.gmra.mrb[0].mxu0 %v741
        %v953 = vpop.f32.mrb[0].mxu0
        %v954 = vadd.f32 %v779, %v953
        %v955 = vpop.f32.mrb[0].mxu0
        %v956 = vadd.f32 %v783, %v955
        %v957 = vpop.f32.mrb[0].mxu0
        %v958 = vpop.f32.mrb[0].mxu0
        %959 = vdwg.mxu0
        %960 = vmatprep.subr.bf16.mxu0 0
        %961 = vmatpush1.bf16.msra.mxu0 %v873
        %962 = vmatprep.subr.bf16.mxu0 0
        %963 = vmatpush1.bf16.msra.mxu0 %v876
        %964 = vmatprep.subr.bf16.mxu0 0
        %965 = vmatpush1.bf16.msra.mxu0 %v879
        %966 = vmatprep.subr.bf16.mxu0 0
        %967 = vmatpush1.bf16.msra.mxu0 %v882
        %968 = vmatprep.subr.bf16.mxu0 0
        %969 = vmatpush1.bf16.msra.mxu0 %v885
        %970 = vmatprep.subr.bf16.mxu0 0
        %971 = vmatpush1.bf16.msra.mxu0 %v888
        %972 = vmatprep.subr.bf16.mxu0 0
        %973 = vmatpush1.bf16.msra.mxu0 %v891
        %974 = vmatprep.subr.bf16.mxu0 0
        %975 = vmatpush1.bf16.msra.mxu0 %v894
        %976 = vmatprep.subr.bf16.mxu0 0
        %977 = vmatpush1.bf16.msra.mxu0 0
        %978 = vmatprep.subr.bf16.mxu0 0
        %979 = vmatpush1.bf16.msra.mxu0 0
        %980 = vmatprep.subr.bf16.mxu0 0
        %981 = vmatpush1.bf16.msra.mxu0 0
        %982 = vmatprep.subr.bf16.mxu0 0
        %983 = vmatpush1.bf16.msra.mxu0 0
        %984 = vmatprep.subr.bf16.mxu0 0
        %985 = vmatpush1.bf16.msra.mxu0 0
        %986 = vmatprep.subr.bf16.mxu0 0
        %987 = vmatpush1.bf16.msra.mxu0 0
        %988 = vmatprep.subr.bf16.mxu0 0
        %989 = vmatpush1.bf16.msra.mxu0 0
        %990 = vmatprep.subr.bf16.mxu0 0
        %991 = vmatpush1.bf16.msra.mxu0 0
        %992 = vmatprep.mubr.bf16.mxu0 0
        %993 = vmatmul.mubr.bf16.gmra.mrb[0].mxu0 %v741
        %v994 = vpop.f32.mrb[0].mxu0
        %v995 = vadd.f32 %v787, %v994
        %v996 = vpop.f32.mrb[0].mxu0
        %v997 = vpop.f32.mrb[0].mxu0
        %v998 = vpop.f32.mrb[0].mxu0
        %999 = vdwg.mxu0
        %v1000 = vpack.c.bf16 %v954, %v954
        %v1001 = vpack.c.bf16 %v956, %v956
        %v1002 = vpack.c.bf16 %v995, %v995
        %vm1003 = vcmask 261120
        %v1005 = vsel %vm1003, %v1000, 0
        %v1008 = vsel %vm1003, %v1001, 0
        %1010 = vmatprep.subr.bf16.mxu0 0
        %1011 = vmatpush1.bf16.xpose.msra.mxu0 %v1008
        %1012 = vmatprep.subr.bf16.mxu0 0
        %1013 = vmatpush1.bf16.xpose.msra.mxu0 0
        %1014 = vmatprep.subr.bf16.mxu0 0
        %1015 = vmatpush1.bf16.xpose.msra.mxu0 0
        %1016 = vmatprep.subr.bf16.mxu0 0
        %1017 = vmatpush1.bf16.xpose.msra.mxu0 0
        %1018 = vmatprep.subr.bf16.mxu0 0
        %1019 = vmatpush1.bf16.xpose.msra.mxu0 0
        %1020 = vmatprep.subr.bf16.mxu0 0
        %1021 = vmatpush1.bf16.xpose.msra.mxu0 0
        %1022 = vmatprep.subr.bf16.mxu0 0
        %1023 = vmatpush1.bf16.xpose.msra.mxu0 0
        %1024 = vmatprep.subr.bf16.mxu0 0
        %1025 = vmatpush1.bf16.xpose.msra.mxu0 0
        %1026 = vmatprep.subr.bf16.mxu0 0
        %1027 = vmatpush1.bf16.xpose.msra.mxu0 0
        %1028 = vmatprep.subr.bf16.mxu0 0
        %1029 = vmatpush1.bf16.xpose.msra.mxu0 0
        %1030 = vmatprep.subr.bf16.mxu0 0
        %1031 = vmatpush1.bf16.xpose.msra.mxu0 0
        %1032 = vmatprep.subr.bf16.mxu0 0
        %1033 = vmatpush1.bf16.xpose.msra.mxu0 0
        %1034 = vmatprep.subr.bf16.mxu0 0
        %1035 = vmatpush1.bf16.xpose.msra.mxu0 0
        %1036 = vmatprep.subr.bf16.mxu0 0
        %1037 = vmatpush1.bf16.xpose.msra.mxu0 0
        %1038 = vmatprep.subr.bf16.mxu0 0
        %1039 = vmatpush1.bf16.xpose.msra.mxu0 0
        %1040 = vmatprep.subr.bf16.mxu0 0
        %1041 = vmatpush1.bf16.xpose.msra.mxu0 0
        %1042 = vmatprep.mubr.bf16.mxu0 0
        %1043 = vmatmul.mubr.bf16.gmra.mrb[0].mxu0 %v1005
        %v1044 = vpop.f32.mrb[0].mxu0
        %v1045 = vadd.f32 0.0, %v1044
        %v1046 = vpop.f32.mrb[0].mxu0
        %v1047 = vpop.f32.mrb[0].mxu0
        %v1048 = vpop.f32.mrb[0].mxu0
        %1049 = vdwg.mxu0
        %v1050 = vmul.f32 %v1045, 0.17677669
        %vm1051 = vcmask 64512
        %v1052 = vsel %vm1051, %v1050, -inf
        %1053 = vmax.xlane.f32.xlu0 %v1052
        %v1054 = vpop.xlane.xlu0 %1053
        %v1055 = vsub.f32 %v1050, %v1054
        %v1056 = vmul.f32 %v1055, 1.442695
        %v1057 = vpow.pop %v1056
        %v1058 = vsel %vm1051, %v1057, 0.0
        %1059 = vadd.xlane.f32.xlu0 %v1058
        %v1060 = vpop.xlane.xlu0 %1059
        %v1061 = vrcp.pop %v1060
        %v1062 = vmul.f32 %v1057, %v1061
        // Predicated region
        $region93: #{tpu_custom_call.1} parent=67 // pred_check
          %p1063 = pneg %p719
        $region94: #{tpu_custom_call.1} parent=67 // pred_check_branch
          %1065 = sbr.rel (%p1063) target = $region96
        $region95: #{tpu_custom_call.1} parent=67 // pred_region
          %v1066 = vmul.f32 %v1062, 0.25
          %1067 = vst.msk [vmem:[%s691] sm:$0xff] %vm1051, %v1066
        $region96: #{tpu_custom_call.1} parent=67 // pred_fallthru
          _
        %v1068 = vpack.c.bf16 %v1062, %v1062
        %v1070 = vsel %vm1051, %v1068, 0
        %vm1072 = vcmask 1043456
        %v1074 = vsel %vm1072, %v1002, 0
        %1076 = vmatprep.subr.bf16.mxu0 0
        %1077 = vmatpush1.bf16.msra.mxu0 %v1074
        %1078 = vmatprep.subr.bf16.mxu0 0
        %1079 = vmatpush1.bf16.msra.mxu0 0
        %1080 = vmatprep.subr.bf16.mxu0 0
        %1081 = vmatpush1.bf16.msra.mxu0 0
        %1082 = vmatprep.subr.bf16.mxu0 0
        %1083 = vmatpush1.bf16.msra.mxu0 0
        %1084 = vmatprep.subr.bf16.mxu0 0
        %1085 = vmatpush1.bf16.msra.mxu0 0
        %1086 = vmatprep.subr.bf16.mxu0 0
        %1087 = vmatpush1.bf16.msra.mxu0 0
        %1088 = vmatprep.subr.bf16.mxu0 0
        %1089 = vmatpush1.bf16.msra.mxu0 0
        %1090 = vmatprep.subr.bf16.mxu0 0
        %1091 = vmatpush1.bf16.msra.mxu0 0
        %1092 = vmatprep.subr.bf16.mxu0 0
        %1093 = vmatpush1.bf16.msra.mxu0 0
        %1094 = vmatprep.subr.bf16.mxu0 0
        %1095 = vmatpush1.bf16.msra.mxu0 0
        %1096 = vmatprep.subr.bf16.mxu0 0
        %1097 = vmatpush1.bf16.msra.mxu0 0
        %1098 = vmatprep.subr.bf16.mxu0 0
        %1099 = vmatpush1.bf16.msra.mxu0 0
        %1100 = vmatprep.subr.bf16.mxu0 0
        %1101 = vmatpush1.bf16.msra.mxu0 0
        %1102 = vmatprep.subr.bf16.mxu0 0
        %1103 = vmatpush1.bf16.msra.mxu0 0
        %1104 = vmatprep.subr.bf16.mxu0 0
        %1105 = vmatpush1.bf16.msra.mxu0 0
        %1106 = vmatprep.subr.bf16.mxu0 0
        %1107 = vmatpush1.bf16.msra.mxu0 0
        %1108 = vmatprep.mubr.bf16.mxu0 0
        %1109 = vmatmul.mubr.bf16.gmra.mrb[0].mxu0 %v1070
        %v1110 = vpop.f32.mrb[0].mxu0
        %v1111 = vadd.f32 0.0, %v1110
        %v1112 = vpop.f32.mrb[0].mxu0
        %v1113 = vpop.f32.mrb[0].mxu0
        %v1114 = vpop.f32.mrb[0].mxu0
        %1115 = vdwg.mxu0
        %1116 = vst.msk [vmem:[#allocation3] sm:$0xff] %vm1003, %v1111
        %1118 = vrot.lane.b32.xlu0 %v1000, 96
        %v1119 = vpop.permute.xlu0 %1118
        %1121 = vrot.lane.b32.xlu0 %v1001, 96
        %v1122 = vpop.permute.xlu0 %1121
        %v1124 = vsel %vm1003, %v1119, 0
        %v1127 = vsel %vm1003, %v1122, 0
        %1129 = vmatprep.subr.bf16.mxu0 0
        %1130 = vmatpush1.bf16.xpose.msra.mxu0 %v1127
        %1131 = vmatprep.subr.bf16.mxu0 0
        %1132 = vmatpush1.bf16.xpose.msra.mxu0 0
        %1133 = vmatprep.subr.bf16.mxu0 0
        %1134 = vmatpush1.bf16.xpose.msra.mxu0 0
        %1135 = vmatprep.subr.bf16.mxu0 0
        %1136 = vmatpush1.bf16.xpose.msra.mxu0 0
        %1137 = vmatprep.subr.bf16.mxu0 0
        %1138 = vmatpush1.bf16.xpose.msra.mxu0 0
        %1139 = vmatprep.subr.bf16.mxu0 0
        %1140 = vmatpush1.bf16.xpose.msra.mxu0 0
        %1141 = vmatprep.subr.bf16.mxu0 0
        %1142 = vmatpush1.bf16.xpose.msra.mxu0 0
        %1143 = vmatprep.subr.bf16.mxu0 0
        %1144 = vmatpush1.bf16.xpose.msra.mxu0 0
        %1145 = vmatprep.subr.bf16.mxu0 0
        %1146 = vmatpush1.bf16.xpose.msra.mxu0 0
        %1147 = vmatprep.subr.bf16.mxu0 0
        %1148 = vmatpush1.bf16.xpose.msra.mxu0 0
        %1149 = vmatprep.subr.bf16.mxu0 0
        %1150 = vmatpush1.bf16.xpose.msra.mxu0 0
        %1151 = vmatprep.subr.bf16.mxu0 0
        %1152 = vmatpush1.bf16.xpose.msra.mxu0 0
        %1153 = vmatprep.subr.bf16.mxu0 0
        %1154 = vmatpush1.bf16.xpose.msra.mxu0 0
        %1155 = vmatprep.subr.bf16.mxu0 0
        %1156 = vmatpush1.bf16.xpose.msra.mxu0 0
        %1157 = vmatprep.subr.bf16.mxu0 0
        %1158 = vmatpush1.bf16.xpose.msra.mxu0 0
        %1159 = vmatprep.subr.bf16.mxu0 0
        %1160 = vmatpush1.bf16.xpose.msra.mxu0 0
        %1161 = vmatprep.mubr.bf16.mxu0 0
        %1162 = vmatmul.mubr.bf16.gmra.mrb[0].mxu0 %v1124
        %v1163 = vpop.f32.mrb[0].mxu0
        %v1164 = vadd.f32 0.0, %v1163
        %v1165 = vpop.f32.mrb[0].mxu0
        %v1166 = vpop.f32.mrb[0].mxu0
        %v1167 = vpop.f32.mrb[0].mxu0
        %1168 = vdwg.mxu0
        %v1169 = vmul.f32 %v1164, 0.17677669
        %v1170 = vsel %vm1051, %v1169, -inf
        %1171 = vmax.xlane.f32.xlu0 %v1170
        %v1172 = vpop.xlane.xlu0 %1171
        %v1173 = vsub.f32 %v1169, %v1172
        %v1174 = vmul.f32 %v1173, 1.442695
        %v1175 = vpow.pop %v1174
        %v1176 = vsel %vm1051, %v1175, 0.0
        %1177 = vadd.xlane.f32.xlu0 %v1176
        %v1178 = vpop.xlane.xlu0 %1177
        %v1179 = vrcp.pop %v1178
        %v1180 = vmul.f32 %v1175, %v1179
        // Predicated region
        $region97: #{tpu_custom_call.1} parent=67 // pred_check
          %p1181 = pneg %p719
        $region98: #{tpu_custom_call.1} parent=67 // pred_check_branch
          %1183 = sbr.rel (%p1181) target = $region100
        $region99: #{tpu_custom_call.1} parent=67 // pred_region
          %v1184 = vld [vmem:[%s691] sm:$0xff]
          %v1185 = vmul.f32 %v1180, 0.25
          %v1186 = vadd.f32 %v1184, %v1185
          %1187 = vst.msk [vmem:[%s691] sm:$0xff] %vm1051, %v1186
        $region100: #{tpu_custom_call.1} parent=67 // pred_fallthru
          _
        %v1188 = vpack.c.bf16 %v1180, %v1180
        %1190 = vrot.lane.b32.xlu0 %v1002, 96
        %v1191 = vpop.permute.xlu0 %1190
        %v1193 = vsel %vm1051, %v1188, 0
        %v1196 = vsel %vm1072, %v1191, 0
        %1198 = vmatprep.subr.bf16.mxu0 0
        %1199 = vmatpush1.bf16.msra.mxu0 %v1196
        %1200 = vmatprep.subr.bf16.mxu0 0
        %1201 = vmatpush1.bf16.msra.mxu0 0
        %1202 = vmatprep.subr.bf16.mxu0 0
        %1203 = vmatpush1.bf16.msra.mxu0 0
        %1204 = vmatprep.subr.bf16.mxu0 0
        %1205 = vmatpush1.bf16.msra.mxu0 0
        %1206 = vmatprep.subr.bf16.mxu0 0
        %1207 = vmatpush1.bf16.msra.mxu0 0
        %1208 = vmatprep.subr.bf16.mxu0 0
        %1209 = vmatpush1.bf16.msra.mxu0 0
        %1210 = vmatprep.subr.bf16.mxu0 0
        %1211 = vmatpush1.bf16.msra.mxu0 0
        %1212 = vmatprep.subr.bf16.mxu0 0
        %1213 = vmatpush1.bf16.msra.mxu0 0
        %1214 = vmatprep.subr.bf16.mxu0 0
        %1215 = vmatpush1.bf16.msra.mxu0 0
        %1216 = vmatprep.subr.bf16.mxu0 0
        %1217 = vmatpush1.bf16.msra.mxu0 0
        %1218 = vmatprep.subr.bf16.mxu0 0
        %1219 = vmatpush1.bf16.msra.mxu0 0
        %1220 = vmatprep.subr.bf16.mxu0 0
        %1221 = vmatpush1.bf16.msra.mxu0 0
        %1222 = vmatprep.subr.bf16.mxu0 0
        %1223 = vmatpush1.bf16.msra.mxu0 0
        %1224 = vmatprep.subr.bf16.mxu0 0
        %1225 = vmatpush1.bf16.msra.mxu0 0
        %1226 = vmatprep.subr.bf16.mxu0 0
        %1227 = vmatpush1.bf16.msra.mxu0 0
        %1228 = vmatprep.subr.bf16.mxu0 0
        %1229 = vmatpush1.bf16.msra.mxu0 0
        %1230 = vmatprep.mubr.bf16.mxu0 0
        %1231 = vmatmul.mubr.bf16.gmra.mrb[0].mxu0 %v1193
        %v1232 = vpop.f32.mrb[0].mxu0
        %v1233 = vadd.f32 0.0, %v1232
        %v1234 = vpop.f32.mrb[0].mxu0
        %v1235 = vpop.f32.mrb[0].mxu0
        %v1236 = vpop.f32.mrb[0].mxu0
        %1237 = vdwg.mxu0
        %1239 = vrot.lane.b32.xlu0 %v1233, 32
        %v1240 = vpop.permute.xlu0 %1239
        %vm1242 = vcmask 523520
        %1243 = vst.msk [vmem:[#allocation3] sm:$0xff] %vm1242, %v1240
        %1244 = vrot.lane.b32.xlu0 %v1000, 64
        %v1245 = vpop.permute.xlu0 %1244
        %1246 = vrot.lane.b32.xlu0 %v1001, 64
        %v1247 = vpop.permute.xlu0 %1246
        %v1249 = vsel %vm1003, %v1245, 0
        %v1252 = vsel %vm1003, %v1247, 0
        %1254 = vmatprep.subr.bf16.mxu0 0
        %1255 = vmatpush1.bf16.xpose.msra.mxu0 %v1252
        %1256 = vmatprep.subr.bf16.mxu0 0
        %1257 = vmatpush1.bf16.xpose.msra.mxu0 0
        %1258 = vmatprep.subr.bf16.mxu0 0
        %1259 = vmatpush1.bf16.xpose.msra.mxu0 0
        %1260 = vmatprep.subr.bf16.mxu0 0
        %1261 = vmatpush1.bf16.xpose.msra.mxu0 0
        %1262 = vmatprep.subr.bf16.mxu0 0
        %1263 = vmatpush1.bf16.xpose.msra.mxu0 0
        %1264 = vmatprep.subr.bf16.mxu0 0
        %1265 = vmatpush1.bf16.xpose.msra.mxu0 0
        %1266 = vmatprep.subr.bf16.mxu0 0
        %1267 = vmatpush1.bf16.xpose.msra.mxu0 0
        %1268 = vmatprep.subr.bf16.mxu0 0
        %1269 = vmatpush1.bf16.xpose.msra.mxu0 0
        %1270 = vmatprep.subr.bf16.mxu0 0
        %1271 = vmatpush1.bf16.xpose.msra.mxu0 0
        %1272 = vmatprep.subr.bf16.mxu0 0
        %1273 = vmatpush1.bf16.xpose.msra.mxu0 0
        %1274 = vmatprep.subr.bf16.mxu0 0
        %1275 = vmatpush1.bf16.xpose.msra.mxu0 0
        %1276 = vmatprep.subr.bf16.mxu0 0
        %1277 = vmatpush1.bf16.xpose.msra.mxu0 0
        %1278 = vmatprep.subr.bf16.mxu0 0
        %1279 = vmatpush1.bf16.xpose.msra.mxu0 0
        %1280 = vmatprep.subr.bf16.mxu0 0
        %1281 = vmatpush1.bf16.xpose.msra.mxu0 0
        %1282 = vmatprep.subr.bf16.mxu0 0
        %1283 = vmatpush1.bf16.xpose.msra.mxu0 0
        %1284 = vmatprep.subr.bf16.mxu0 0
        %1285 = vmatpush1.bf16.xpose.msra.mxu0 0
        %1286 = vmatprep.mubr.bf16.mxu0 0
        %1287 = vmatmul.mubr.bf16.gmra.mrb[0].mxu0 %v1249
        %v1288 = vpop.f32.mrb[0].mxu0
        %v1289 = vadd.f32 0.0, %v1288
        %v1290 = vpop.f32.mrb[0].mxu0
        %v1291 = vpop.f32.mrb[0].mxu0
        %v1292 = vpop.f32.mrb[0].mxu0
        %1293 = vdwg.mxu0
        %v1294 = vmul.f32 %v1289, 0.17677669
        %v1295 = vsel %vm1051, %v1294, -inf
        %1296 = vmax.xlane.f32.xlu0 %v1295
        %v1297 = vpop.xlane.xlu0 %1296
        %v1298 = vsub.f32 %v1294, %v1297
        %v1299 = vmul.f32 %v1298, 1.442695
        %v1300 = vpow.pop %v1299
        %v1301 = vsel %vm1051, %v1300, 0.0
        %1302 = vadd.xlane.f32.xlu0 %v1301
        %v1303 = vpop.xlane.xlu0 %1302
        %v1304 = vrcp.pop %v1303
        %v1305 = vmul.f32 %v1300, %v1304
        // Predicated region
        $region101: #{tpu_custom_call.1} parent=67 // pred_check
          %p1306 = pneg %p719
        $region102: #{tpu_custom_call.1} parent=67 // pred_check_branch
          %1308 = sbr.rel (%p1306) target = $region104
        $region103: #{tpu_custom_call.1} parent=67 // pred_region
          %v1309 = vld [vmem:[%s691] sm:$0xff]
          %v1310 = vmul.f32 %v1305, 0.25
          %v1311 = vadd.f32 %v1309, %v1310
          %1312 = vst.msk [vmem:[%s691] sm:$0xff] %vm1051, %v1311
        $region104: #{tpu_custom_call.1} parent=67 // pred_fallthru
          _
        %v1313 = vpack.c.bf16 %v1305, %v1305
        %1314 = vrot.lane.b32.xlu0 %v1002, 64
        %v1315 = vpop.permute.xlu0 %1314
        %v1317 = vsel %vm1051, %v1313, 0
        %v1320 = vsel %vm1072, %v1315, 0
        %1322 = vmatprep.subr.bf16.mxu0 0
        %1323 = vmatpush1.bf16.msra.mxu0 %v1320
        %1324 = vmatprep.subr.bf16.mxu0 0
        %1325 = vmatpush1.bf16.msra.mxu0 0
        %1326 = vmatprep.subr.bf16.mxu0 0
        %1327 = vmatpush1.bf16.msra.mxu0 0
        %1328 = vmatprep.subr.bf16.mxu0 0
        %1329 = vmatpush1.bf16.msra.mxu0 0
        %1330 = vmatprep.subr.bf16.mxu0 0
        %1331 = vmatpush1.bf16.msra.mxu0 0
        %1332 = vmatprep.subr.bf16.mxu0 0
        %1333 = vmatpush1.bf16.msra.mxu0 0
        %1334 = vmatprep.subr.bf16.mxu0 0
        %1335 = vmatpush1.bf16.msra.mxu0 0
        %1336 = vmatprep.subr.bf16.mxu0 0
        %1337 = vmatpush1.bf16.msra.mxu0 0
        %1338 = vmatprep.subr.bf16.mxu0 0
        %1339 = vmatpush1.bf16.msra.mxu0 0
        %1340 = vmatprep.subr.bf16.mxu0 0
        %1341 = vmatpush1.bf16.msra.mxu0 0
        %1342 = vmatprep.subr.bf16.mxu0 0
        %1343 = vmatpush1.bf16.msra.mxu0 0
        %1344 = vmatprep.subr.bf16.mxu0 0
        %1345 = vmatpush1.bf16.msra.mxu0 0
        %1346 = vmatprep.subr.bf16.mxu0 0
        %1347 = vmatpush1.bf16.msra.mxu0 0
        %1348 = vmatprep.subr.bf16.mxu0 0
        %1349 = vmatpush1.bf16.msra.mxu0 0
        %1350 = vmatprep.subr.bf16.mxu0 0
        %1351 = vmatpush1.bf16.msra.mxu0 0
        %1352 = vmatprep.subr.bf16.mxu0 0
        %1353 = vmatpush1.bf16.msra.mxu0 0
        %1354 = vmatprep.mubr.bf16.mxu0 0
        %1355 = vmatmul.mubr.bf16.gmra.mrb[0].mxu0 %v1317
        %v1356 = vpop.f32.mrb[0].mxu0
        %v1357 = vadd.f32 0.0, %v1356
        %v1358 = vpop.f32.mrb[0].mxu0
        %v1359 = vpop.f32.mrb[0].mxu0
        %v1360 = vpop.f32.mrb[0].mxu0
        %1361 = vdwg.mxu0
        %1363 = vrot.lane.b32.xlu0 %v1357, 64
        %v1364 = vpop.permute.xlu0 %1363
        %vm1366 = vcmask 785920
        %1367 = vst.msk [vmem:[#allocation3] sm:$0xff] %vm1366, %v1364
        %1368 = vrot.lane.b32.xlu0 %v1000, 32
        %v1369 = vpop.permute.xlu0 %1368
        %1370 = vrot.lane.b32.xlu0 %v1001, 32
        %v1371 = vpop.permute.xlu0 %1370
        %v1373 = vsel %vm1003, %v1369, 0
        %v1376 = vsel %vm1003, %v1371, 0
        %1378 = vmatprep.subr.bf16.mxu0 0
        %1379 = vmatpush1.bf16.xpose.msra.mxu0 %v1376
        %1380 = vmatprep.subr.bf16.mxu0 0
        %1381 = vmatpush1.bf16.xpose.msra.mxu0 0
        %1382 = vmatprep.subr.bf16.mxu0 0
        %1383 = vmatpush1.bf16.xpose.msra.mxu0 0
        %1384 = vmatprep.subr.bf16.mxu0 0
        %1385 = vmatpush1.bf16.xpose.msra.mxu0 0
        %1386 = vmatprep.subr.bf16.mxu0 0
        %1387 = vmatpush1.bf16.xpose.msra.mxu0 0
        %1388 = vmatprep.subr.bf16.mxu0 0
        %1389 = vmatpush1.bf16.xpose.msra.mxu0 0
        %1390 = vmatprep.subr.bf16.mxu0 0
        %1391 = vmatpush1.bf16.xpose.msra.mxu0 0
        %1392 = vmatprep.subr.bf16.mxu0 0
        %1393 = vmatpush1.bf16.xpose.msra.mxu0 0
        %1394 = vmatprep.subr.bf16.mxu0 0
        %1395 = vmatpush1.bf16.xpose.msra.mxu0 0
        %1396 = vmatprep.subr.bf16.mxu0 0
        %1397 = vmatpush1.bf16.xpose.msra.mxu0 0
        %1398 = vmatprep.subr.bf16.mxu0 0
        %1399 = vmatpush1.bf16.xpose.msra.mxu0 0
        %1400 = vmatprep.subr.bf16.mxu0 0
        %1401 = vmatpush1.bf16.xpose.msra.mxu0 0
        %1402 = vmatprep.subr.bf16.mxu0 0
        %1403 = vmatpush1.bf16.xpose.msra.mxu0 0
        %1404 = vmatprep.subr.bf16.mxu0 0
        %1405 = vmatpush1.bf16.xpose.msra.mxu0 0
        %1406 = vmatprep.subr.bf16.mxu0 0
        %1407 = vmatpush1.bf16.xpose.msra.mxu0 0
        %1408 = vmatprep.subr.bf16.mxu0 0
        %1409 = vmatpush1.bf16.xpose.msra.mxu0 0
        %1410 = vmatprep.mubr.bf16.mxu0 0
        %1411 = vmatmul.mubr.bf16.gmra.mrb[0].mxu0 %v1373
        %v1412 = vpop.f32.mrb[0].mxu0
        %v1413 = vadd.f32 0.0, %v1412
        %v1414 = vpop.f32.mrb[0].mxu0
        %v1415 = vpop.f32.mrb[0].mxu0
        %v1416 = vpop.f32.mrb[0].mxu0
        %1417 = vdwg.mxu0
        %v1418 = vmul.f32 %v1413, 0.17677669
        %v1419 = vsel %vm1051, %v1418, -inf
        %1420 = vmax.xlane.f32.xlu0 %v1419
        %v1421 = vpop.xlane.xlu0 %1420
        %v1422 = vsub.f32 %v1418, %v1421
        %v1423 = vmul.f32 %v1422, 1.442695
        %v1424 = vpow.pop %v1423
        %v1425 = vsel %vm1051, %v1424, 0.0
        %1426 = vadd.xlane.f32.xlu0 %v1425
        %v1427 = vpop.xlane.xlu0 %1426
        %v1428 = vrcp.pop %v1427
        %v1429 = vmul.f32 %v1424, %v1428
        // Predicated region
        $region105: #{tpu_custom_call.1} parent=67 // pred_check
          %p1430 = pneg %p719
        $region106: #{tpu_custom_call.1} parent=67 // pred_check_branch
          %1432 = sbr.rel (%p1430) target = $region108
        $region107: #{tpu_custom_call.1} parent=67 // pred_region
          %v1433 = vld [vmem:[%s691] sm:$0xff]
          %v1434 = vmul.f32 %v1429, 0.25
          %v1435 = vadd.f32 %v1433, %v1434
          %1436 = vst.msk [vmem:[%s691] sm:$0xff] %vm1051, %v1435
        $region108: #{tpu_custom_call.1} parent=67 // pred_fallthru
          _
        %v1437 = vpack.c.bf16 %v1429, %v1429
        %1438 = vrot.lane.b32.xlu0 %v1002, 32
        %v1439 = vpop.permute.xlu0 %1438
        %v1441 = vsel %vm1051, %v1437, 0
        %v1444 = vsel %vm1072, %v1439, 0
        %1446 = vmatprep.subr.bf16.mxu0 0
        %1447 = vmatpush1.bf16.msra.mxu0 %v1444
        %1448 = vmatprep.subr.bf16.mxu0 0
        %1449 = vmatpush1.bf16.msra.mxu0 0
        %1450 = vmatprep.subr.bf16.mxu0 0
        %1451 = vmatpush1.bf16.msra.mxu0 0
        %1452 = vmatprep.subr.bf16.mxu0 0
        %1453 = vmatpush1.bf16.msra.mxu0 0
        %1454 = vmatprep.subr.bf16.mxu0 0
        %1455 = vmatpush1.bf16.msra.mxu0 0
        %1456 = vmatprep.subr.bf16.mxu0 0
        %1457 = vmatpush1.bf16.msra.mxu0 0
        %1458 = vmatprep.subr.bf16.mxu0 0
        %1459 = vmatpush1.bf16.msra.mxu0 0
        %1460 = vmatprep.subr.bf16.mxu0 0
        %1461 = vmatpush1.bf16.msra.mxu0 0
        %1462 = vmatprep.subr.bf16.mxu0 0
        %1463 = vmatpush1.bf16.msra.mxu0 0
        %1464 = vmatprep.subr.bf16.mxu0 0
        %1465 = vmatpush1.bf16.msra.mxu0 0
        %1466 = vmatprep.subr.bf16.mxu0 0
        %1467 = vmatpush1.bf16.msra.mxu0 0
        %1468 = vmatprep.subr.bf16.mxu0 0
        %1469 = vmatpush1.bf16.msra.mxu0 0
        %1470 = vmatprep.subr.bf16.mxu0 0
        %1471 = vmatpush1.bf16.msra.mxu0 0
        %1472 = vmatprep.subr.bf16.mxu0 0
        %1473 = vmatpush1.bf16.msra.mxu0 0
        %1474 = vmatprep.subr.bf16.mxu0 0
        %1475 = vmatpush1.bf16.msra.mxu0 0
        %1476 = vmatprep.subr.bf16.mxu0 0
        %1477 = vmatpush1.bf16.msra.mxu0 0
        %1478 = vmatprep.mubr.bf16.mxu0 0
        %1479 = vmatmul.mubr.bf16.gmra.mrb[0].mxu0 %v1441
        %v1480 = vpop.f32.mrb[0].mxu0
        %v1481 = vadd.f32 0.0, %v1480
        %v1482 = vpop.f32.mrb[0].mxu0
        %v1483 = vpop.f32.mrb[0].mxu0
        %v1484 = vpop.f32.mrb[0].mxu0
        %1485 = vdwg.mxu0
        %1487 = vrot.lane.b32.xlu0 %v1481, 96
        %v1488 = vpop.permute.xlu0 %1487
        %vm1490 = vcmask 1048320
        %1491 = vst.msk [vmem:[#allocation3] sm:$0xff] %vm1490, %v1488
        %v1492 = vld [vmem:[#allocation3] sm:$0xff]
        %v1493 = vpack.c.bf16 %v1492, %v1492
        %v1494 = vld [vmem:[%s585] sm:$0xf]
        %v1495 = vld [vmem:[%s585 + $0x4] sm:$0xf]
        %v1496 = vld [vmem:[%s585 + $0x8] sm:$0xf]
        %v1497 = vld [vmem:[%s585 + $0xc] sm:$0xf]
        %v1498 = vld [vmem:[%s585 + $0x10] sm:$0xf]
        %v1499 = vld [vmem:[%s585 + $0x14] sm:$0xf]
        %v1500 = vld [vmem:[%s585 + $0x18] sm:$0xf]
        %v1501 = vld [vmem:[%s585 + $0x1c] sm:$0xf]
        %v1502 = vld [vmem:[%s585 + $0x20] sm:$0xf]
        %v1503 = vld [vmem:[%s585 + $0x24] sm:$0xf]
        %v1504 = vld [vmem:[%s585 + $0x28] sm:$0xf]
        %v1505 = vld [vmem:[%s585 + $0x2c] sm:$0xf]
        %v1506 = vld [vmem:[%s585 + $0x30] sm:$0xf]
        %v1507 = vld [vmem:[%s585 + $0x34] sm:$0xf]
        %v1508 = vld [vmem:[%s585 + $0x38] sm:$0xf]
        %v1509 = vld [vmem:[%s585 + $0x3c] sm:$0xf]
        %v1510 = vld [vmem:[%s698] sm:$0x1]
        %v1512 = vlaneseq
        %v1513 = vshrl.u32 %v1512, 7
        %v1514 = vsub.s32 0, %v1513
        %v1515 = vrot.slane %v1510, %v1514
        %v1533 = vunpack.c.l.b16 %v1494
        %v1534 = vunpack.c.l.b16 %v1495
        %v1535 = vunpack.c.l.b16 %v1496
        %v1536 = vunpack.c.l.b16 %v1497
        %v1537 = vunpack.c.l.b16 %v1498
        %v1538 = vunpack.c.l.b16 %v1499
        %v1539 = vunpack.c.l.b16 %v1500
        %v1540 = vunpack.c.l.b16 %v1501
        %v1541 = vunpack.c.l.b16 %v1502
        %v1542 = vunpack.c.l.b16 %v1503
        %v1543 = vunpack.c.l.b16 %v1504
        %v1544 = vunpack.c.l.b16 %v1505
        %v1545 = vunpack.c.l.b16 %v1506
        %v1546 = vunpack.c.l.b16 %v1507
        %v1547 = vunpack.c.l.b16 %v1508
        %v1548 = vunpack.c.l.b16 %v1509
        %v1549 = vpack.c.b16 %v1534, %v1533
        %v1550 = vpack.c.b16 %v1536, %v1535
        %v1551 = vpack.c.b16 %v1538, %v1537
        %v1552 = vpack.c.b16 %v1540, %v1539
        %v1553 = vpack.c.b16 %v1542, %v1541
        %v1554 = vpack.c.b16 %v1544, %v1543
        %v1555 = vpack.c.b16 %v1546, %v1545
        %v1556 = vpack.c.b16 %v1548, %v1547
        %1565 = vmatprep.subr.bf16.mxu0 0
        %1566 = vmatpush1.bf16.msra.mxu0 %v1549
        %1567 = vmatprep.subr.bf16.mxu0 0
        %1568 = vmatpush1.bf16.msra.mxu0 %v1550
        %1569 = vmatprep.subr.bf16.mxu0 0
        %1570 = vmatpush1.bf16.msra.mxu0 %v1551
        %1571 = vmatprep.subr.bf16.mxu0 0
        %1572 = vmatpush1.bf16.msra.mxu0 %v1552
        %1573 = vmatprep.subr.bf16.mxu0 0
        %1574 = vmatpush1.bf16.msra.mxu0 %v1553
        %1575 = vmatprep.subr.bf16.mxu0 0
        %1576 = vmatpush1.bf16.msra.mxu0 %v1554
        %1577 = vmatprep.subr.bf16.mxu0 0
        %1578 = vmatpush1.bf16.msra.mxu0 %v1555
        %1579 = vmatprep.subr.bf16.mxu0 0
        %1580 = vmatpush1.bf16.msra.mxu0 %v1556
        %1581 = vmatprep.subr.bf16.mxu0 0
        %1582 = vmatpush1.bf16.msra.mxu0 0
        %1583 = vmatprep.subr.bf16.mxu0 0
        %1584 = vmatpush1.bf16.msra.mxu0 0
        %1585 = vmatprep.subr.bf16.mxu0 0
        %1586 = vmatpush1.bf16.msra.mxu0 0
        %1587 = vmatprep.subr.bf16.mxu0 0
        %1588 = vmatpush1.bf16.msra.mxu0 0
        %1589 = vmatprep.subr.bf16.mxu0 0
        %1590 = vmatpush1.bf16.msra.mxu0 0
        %1591 = vmatprep.subr.bf16.mxu0 0
        %1592 = vmatpush1.bf16.msra.mxu0 0
        %1593 = vmatprep.subr.bf16.mxu0 0
        %1594 = vmatpush1.bf16.msra.mxu0 0
        %1595 = vmatprep.subr.bf16.mxu0 0
        %1596 = vmatpush1.bf16.msra.mxu0 0
        %1597 = vmatprep.mubr.bf16.mxu0 0
        %1598 = vmatmul.mubr.bf16.gmra.mrb[0].mxu0 %v1493
        %v1599 = vpop.f32.mrb[0].mxu0
        %v1600 = vadd.f32 %v1515, %v1599
        %v1601 = vpop.f32.mrb[0].mxu0
        %v1602 = vpop.f32.mrb[0].mxu0
        %v1603 = vpop.f32.mrb[0].mxu0
        %1604 = vdwg.mxu0
        %v1605 = vadd.f32 %v740, %v1600
        %v1606 = vld [vmem:[%s708] sm:$0x1]
        %v1607 = vld [vmem:[%s711] sm:$0x1]
        %1608 = vadd.xlane.f32.xlu0 %v1605
        %v1609 = vpop.xlane.xlu0 %1608
        %v1610 = vrcp.pop 128.0
        %v1611 = vmul.f32 %v1609, %v1610
        %v1612 = vsub.f32 %v1605, %v1611
        %v1613 = vmul.f32 %v1612, %v1612
        %1614 = vadd.xlane.f32.xlu0 %v1613
        %v1615 = vpop.xlane.xlu0 %1614
        %v1616 = vmul.f32 %v1615, %v1610
        %v1617 = vadd.f32 %v1616, 1e-05
        %v1618 = vrsqrt.pop %v1617
        %v1619 = vmul.f32 %v1612, %v1618
        %v1621 = vlaneseq
        %v1622 = vshrl.u32 %v1621, 7
        %v1623 = vsub.s32 0, %v1622
        %v1624 = vrot.slane %v1606, %v1623
        %v1626 = vmul.f32 %v1619, %v1624
        %v1628 = vlaneseq
        %v1629 = vshrl.u32 %v1628, 7
        %v1630 = vsub.s32 0, %v1629
        %v1631 = vrot.slane %v1607, %v1630
        %v1633 = vadd.f32 %v1626, %v1631
        %v1634 = vpack.c.bf16 %v1633, %v1633
        %v1635 = vld [vmem:[%s594] sm:$0xff]
        %v1636 = vld [vmem:[%s594 + $0x8] sm:$0xff]
        %v1637 = vld [vmem:[%s594 + $0x10] sm:$0xff]
        %v1638 = vld [vmem:[%s594 + $0x18] sm:$0xff]
        %v1639 = vld [vmem:[%s594 + $0x20] sm:$0xff]
        %v1640 = vld [vmem:[%s594 + $0x28] sm:$0xff]
        %v1641 = vld [vmem:[%s594 + $0x30] sm:$0xff]
        %v1642 = vld [vmem:[%s594 + $0x38] sm:$0xff]
        %v1643 = vld [vmem:[%s594 + $0x40] sm:$0xff]
        %v1644 = vld [vmem:[%s594 + $0x48] sm:$0xff]
        %v1645 = vld [vmem:[%s594 + $0x50] sm:$0xff]
        %v1646 = vld [vmem:[%s594 + $0x58] sm:$0xff]
        %v1647 = vld [vmem:[%s594 + $0x60] sm:$0xff]
        %v1648 = vld [vmem:[%s594 + $0x68] sm:$0xff]
        %v1649 = vld [vmem:[%s594 + $0x70] sm:$0xff]
        %v1650 = vld [vmem:[%s594 + $0x78] sm:$0xff]
        %v1651 = vld [vmem:[%s702] sm:$0x3]
        %v1653 = vlaneseq
        %v1654 = vshrl.u32 %v1653, 7
        %v1655 = vsub.s32 0, %v1654
        %v1656 = vrot.slane %v1651, %v1655
        %v1657 = vlaneseq
        %v1658 = vshrl.u32 %v1657, 7
        %v1659 = vsub.s32 1, %v1658
        %v1660 = vrot.slane %v1651, %v1659
        %v1679 = vunpack.c.l.b16 %v1635
        %v1680 = vunpack.c.h.b16 %v1635
        %v1681 = vunpack.c.l.b16 %v1636
        %v1682 = vunpack.c.h.b16 %v1636
        %v1683 = vunpack.c.l.b16 %v1637
        %v1684 = vunpack.c.h.b16 %v1637
        %v1685 = vunpack.c.l.b16 %v1638
        %v1686 = vunpack.c.h.b16 %v1638
        %v1687 = vunpack.c.l.b16 %v1639
        %v1688 = vunpack.c.h.b16 %v1639
        %v1689 = vunpack.c.l.b16 %v1640
        %v1690 = vunpack.c.h.b16 %v1640
        %v1691 = vunpack.c.l.b16 %v1641
        %v1692 = vunpack.c.h.b16 %v1641
        %v1693 = vunpack.c.l.b16 %v1642
        %v1694 = vunpack.c.h.b16 %v1642
        %v1695 = vunpack.c.l.b16 %v1643
        %v1696 = vunpack.c.h.b16 %v1643
        %v1697 = vunpack.c.l.b16 %v1644
        %v1698 = vunpack.c.h.b16 %v1644
        %v1699 = vunpack.c.l.b16 %v1645
        %v1700 = vunpack.c.h.b16 %v1645
        %v1701 = vunpack.c.l.b16 %v1646
        %v1702 = vunpack.c.h.b16 %v1646
        %v1703 = vunpack.c.l.b16 %v1647
        %v1704 = vunpack.c.h.b16 %v1647
        %v1705 = vunpack.c.l.b16 %v1648
        %v1706 = vunpack.c.h.b16 %v1648
        %v1707 = vunpack.c.l.b16 %v1649
        %v1708 = vunpack.c.h.b16 %v1649
        %v1709 = vunpack.c.l.b16 %v1650
        %v1710 = vunpack.c.h.b16 %v1650
        %v1711 = vpack.c.b16 %v1681, %v1679
        %v1712 = vpack.c.b16 %v1682, %v1680
        %v1713 = vpack.c.b16 %v1685, %v1683
        %v1714 = vpack.c.b16 %v1686, %v1684
        %v1715 = vpack.c.b16 %v1689, %v1687
        %v1716 = vpack.c.b16 %v1690, %v1688
        %v1717 = vpack.c.b16 %v1693, %v1691
        %v1718 = vpack.c.b16 %v1694, %v1692
        %v1719 = vpack.c.b16 %v1697, %v1695
        %v1720 = vpack.c.b16 %v1698, %v1696
        %v1721 = vpack.c.b16 %v1701, %v1699
        %v1722 = vpack.c.b16 %v1702, %v1700
        %v1723 = vpack.c.b16 %v1705, %v1703
        %v1724 = vpack.c.b16 %v1706, %v1704
        %v1725 = vpack.c.b16 %v1709, %v1707
        %v1726 = vpack.c.b16 %v1710, %v1708
        %1743 = vmatprep.subr.bf16.mxu0 %v1712
        %1744 = vmatpush1.bf16.msra.mxu0 %v1711
        %1745 = vmatprep.subr.bf16.mxu0 %v1714
        %1746 = vmatpush1.bf16.msra.mxu0 %v1713
        %1747 = vmatprep.subr.bf16.mxu0 %v1716
        %1748 = vmatpush1.bf16.msra.mxu0 %v1715
        %1749 = vmatprep.subr.bf16.mxu0 %v1718
        %1750 = vmatpush1.bf16.msra.mxu0 %v1717
        %1751 = vmatprep.subr.bf16.mxu0 %v1720
        %1752 = vmatpush1.bf16.msra.mxu0 %v1719
        %1753 = vmatprep.subr.bf16.mxu0 %v1722
        %1754 = vmatpush1.bf16.msra.mxu0 %v1721
        %1755 = vmatprep.subr.bf16.mxu0 %v1724
        %1756 = vmatpush1.bf16.msra.mxu0 %v1723
        %1757 = vmatprep.subr.bf16.mxu0 %v1726
        %1758 = vmatpush1.bf16.msra.mxu0 %v1725
        %1759 = vmatprep.subr.bf16.mxu0 0
        %1760 = vmatpush1.bf16.msra.mxu0 0
        %1761 = vmatprep.subr.bf16.mxu0 0
        %1762 = vmatpush1.bf16.msra.mxu0 0
        %1763 = vmatprep.subr.bf16.mxu0 0
        %1764 = vmatpush1.bf16.msra.mxu0 0
        %1765 = vmatprep.subr.bf16.mxu0 0
        %1766 = vmatpush1.bf16.msra.mxu0 0
        %1767 = vmatprep.subr.bf16.mxu0 0
        %1768 = vmatpush1.bf16.msra.mxu0 0
        %1769 = vmatprep.subr.bf16.mxu0 0
        %1770 = vmatpush1.bf16.msra.mxu0 0
        %1771 = vmatprep.subr.bf16.mxu0 0
        %1772 = vmatpush1.bf16.msra.mxu0 0
        %1773 = vmatprep.subr.bf16.mxu0 0
        %1774 = vmatpush1.bf16.msra.mxu0 0
        %1775 = vmatprep.mubr.bf16.mxu0 0
        %1776 = vmatmul.mubr.bf16.gmra.mrb[0].mxu0 %v1634
        %v1777 = vpop.f32.mrb[0].mxu0
        %v1778 = vadd.f32 %v1656, %v1777
        %v1779 = vpop.f32.mrb[0].mxu0
        %v1780 = vadd.f32 %v1660, %v1779
        %v1781 = vpop.f32.mrb[0].mxu0
        %v1782 = vpop.f32.mrb[0].mxu0
        %1783 = vdwg.mxu0
        %v1784 = vmax.f32 %v1778, 0.0
        %v1785 = vmax.f32 %v1780, 0.0
        %v1786 = vpack.c.bf16 %v1784, %v1784
        %v1787 = vpack.c.bf16 %v1785, %v1785
        %v1788 = vld [vmem:[%s603] sm:$0xf]
        %v1789 = vld [vmem:[%s603 + $0x4] sm:$0xf]
        %v1790 = vld [vmem:[%s603 + $0x8] sm:$0xf]
        %v1791 = vld [vmem:[%s603 + $0xc] sm:$0xf]
        %v1792 = vld [vmem:[%s603 + $0x10] sm:$0xf]
        %v1793 = vld [vmem:[%s603 + $0x14] sm:$0xf]
        %v1794 = vld [vmem:[%s603 + $0x18] sm:$0xf]
        %v1795 = vld [vmem:[%s603 + $0x1c] sm:$0xf]
        %v1796 = vld [vmem:[%s603 + $0x20] sm:$0xf]
        %v1797 = vld [vmem:[%s603 + $0x24] sm:$0xf]
        %v1798 = vld [vmem:[%s603 + $0x28] sm:$0xf]
        %v1799 = vld [vmem:[%s603 + $0x2c] sm:$0xf]
        %v1800 = vld [vmem:[%s603 + $0x30] sm:$0xf]
        %v1801 = vld [vmem:[%s603 + $0x34] sm:$0xf]
        %v1802 = vld [vmem:[%s603 + $0x38] sm:$0xf]
        %v1803 = vld [vmem:[%s603 + $0x3c] sm:$0xf]
        %v1804 = vld [vmem:[%s603 + $0x40] sm:$0xf]
        %v1805 = vld [vmem:[%s603 + $0x44] sm:$0xf]
        %v1806 = vld [vmem:[%s603 + $0x48] sm:$0xf]
        %v1807 = vld [vmem:[%s603 + $0x4c] sm:$0xf]
        %v1808 = vld [vmem:[%s603 + $0x50] sm:$0xf]
        %v1809 = vld [vmem:[%s603 + $0x54] sm:$0xf]
        %v1810 = vld [vmem:[%s603 + $0x58] sm:$0xf]
        %v1811 = vld [vmem:[%s603 + $0x5c] sm:$0xf]
        %v1812 = vld [vmem:[%s603 + $0x60] sm:$0xf]
        %v1813 = vld [vmem:[%s603 + $0x64] sm:$0xf]
        %v1814 = vld [vmem:[%s603 + $0x68] sm:$0xf]
        %v1815 = vld [vmem:[%s603 + $0x6c] sm:$0xf]
        %v1816 = vld [vmem:[%s603 + $0x70] sm:$0xf]
        %v1817 = vld [vmem:[%s603 + $0x74] sm:$0xf]
        %v1818 = vld [vmem:[%s603 + $0x78] sm:$0xf]
        %v1819 = vld [vmem:[%s603 + $0x7c] sm:$0xf]
        %v1820 = vld [vmem:[%s705] sm:$0x1]
        %v1822 = vlaneseq
        %v1823 = vshrl.u32 %v1822, 7
        %v1824 = vsub.s32 0, %v1823
        %v1825 = vrot.slane %v1820, %v1824
        %v1859 = vunpack.c.l.b16 %v1788
        %v1860 = vunpack.c.l.b16 %v1789
        %v1861 = vunpack.c.l.b16 %v1790
        %v1862 = vunpack.c.l.b16 %v1791
        %v1863 = vunpack.c.l.b16 %v1792
        %v1864 = vunpack.c.l.b16 %v1793
        %v1865 = vunpack.c.l.b16 %v1794
        %v1866 = vunpack.c.l.b16 %v1795
        %v1867 = vunpack.c.l.b16 %v1796
        %v1868 = vunpack.c.l.b16 %v1797
        %v1869 = vunpack.c.l.b16 %v1798
        %v1870 = vunpack.c.l.b16 %v1799
        %v1871 = vunpack.c.l.b16 %v1800
        %v1872 = vunpack.c.l.b16 %v1801
        %v1873 = vunpack.c.l.b16 %v1802
        %v1874 = vunpack.c.l.b16 %v1803
        %v1875 = vunpack.c.l.b16 %v1804
        %v1876 = vunpack.c.l.b16 %v1805
        %v1877 = vunpack.c.l.b16 %v1806
        %v1878 = vunpack.c.l.b16 %v1807
        %v1879 = vunpack.c.l.b16 %v1808
        %v1880 = vunpack.c.l.b16 %v1809
        %v1881 = vunpack.c.l.b16 %v1810
        %v1882 = vunpack.c.l.b16 %v1811
        %v1883 = vunpack.c.l.b16 %v1812
        %v1884 = vunpack.c.l.b16 %v1813
        %v1885 = vunpack.c.l.b16 %v1814
        %v1886 = vunpack.c.l.b16 %v1815
        %v1887 = vunpack.c.l.b16 %v1816
        %v1888 = vunpack.c.l.b16 %v1817
        %v1889 = vunpack.c.l.b16 %v1818
        %v1890 = vunpack.c.l.b16 %v1819
        %v1891 = vpack.c.b16 %v1860, %v1859
        %v1892 = vpack.c.b16 %v1862, %v1861
        %v1893 = vpack.c.b16 %v1864, %v1863
        %v1894 = vpack.c.b16 %v1866, %v1865
        %v1895 = vpack.c.b16 %v1868, %v1867
        %v1896 = vpack.c.b16 %v1870, %v1869
        %v1897 = vpack.c.b16 %v1872, %v1871
        %v1898 = vpack.c.b16 %v1874, %v1873
        %v1899 = vpack.c.b16 %v1876, %v1875
        %v1900 = vpack.c.b16 %v1878, %v1877
        %v1901 = vpack.c.b16 %v1880, %v1879
        %v1902 = vpack.c.b16 %v1882, %v1881
        %v1903 = vpack.c.b16 %v1884, %v1883
        %v1904 = vpack.c.b16 %v1886, %v1885
        %v1905 = vpack.c.b16 %v1888, %v1887
        %v1906 = vpack.c.b16 %v1890, %v1889
        %1923 = vmatprep.subr.bf16.mxu0 0
        %1924 = vmatpush1.bf16.msra.mxu0 %v1891
        %1925 = vmatprep.subr.bf16.mxu0 0
        %1926 = vmatpush1.bf16.msra.mxu0 %v1892
        %1927 = vmatprep.subr.bf16.mxu0 0
        %1928 = vmatpush1.bf16.msra.mxu0 %v1893
        %1929 = vmatprep.subr.bf16.mxu0 0
        %1930 = vmatpush1.bf16.msra.mxu0 %v1894
        %1931 = vmatprep.subr.bf16.mxu0 0
        %1932 = vmatpush1.bf16.msra.mxu0 %v1895
        %1933 = vmatprep.subr.bf16.mxu0 0
        %1934 = vmatpush1.bf16.msra.mxu0 %v1896
        %1935 = vmatprep.subr.bf16.mxu0 0
        %1936 = vmatpush1.bf16.msra.mxu0 %v1897
        %1937 = vmatprep.subr.bf16.mxu0 0
        %1938 = vmatpush1.bf16.msra.mxu0 %v1898
        %1939 = vmatprep.subr.bf16.mxu0 0
        %1940 = vmatpush1.bf16.msra.mxu0 %v1899
        %1941 = vmatprep.subr.bf16.mxu0 0
        %1942 = vmatpush1.bf16.msra.mxu0 %v1900
        %1943 = vmatprep.subr.bf16.mxu0 0
        %1944 = vmatpush1.bf16.msra.mxu0 %v1901
        %1945 = vmatprep.subr.bf16.mxu0 0
        %1946 = vmatpush1.bf16.msra.mxu0 %v1902
        %1947 = vmatprep.subr.bf16.mxu0 0
        %1948 = vmatpush1.bf16.msra.mxu0 %v1903
        %1949 = vmatprep.subr.bf16.mxu0 0
        %1950 = vmatpush1.bf16.msra.mxu0 %v1904
        %1951 = vmatprep.subr.bf16.mxu0 0
        %1952 = vmatpush1.bf16.msra.mxu0 %v1905
        %1953 = vmatprep.subr.bf16.mxu0 0
        %1954 = vmatpush1.bf16.msra.mxu0 %v1906
        %1955 = vmatprep.mubr.bf16.mxu0 %v1787
        %1956 = vmatmul.mubr.bf16.gmra.mrb[0].mxu0 %v1786
        %v1957 = vpop.f32.mrb[0].mxu0
        %v1958 = vadd.f32 %v1825, %v1957
        %v1959 = vpop.f32.mrb[0].mxu0
        %v1960 = vpop.f32.mrb[0].mxu0
        %v1961 = vpop.f32.mrb[0].mxu0
        %1962 = vdwg.mxu0
        %v1963 = vadd.f32 %v1633, %v1958
        %v1964 = vld [vmem:[%s714] sm:$0x1]
        %v1965 = vld [vmem:[%s717] sm:$0x1]
        %1966 = vadd.xlane.f32.xlu0 %v1963
        %v1967 = vpop.xlane.xlu0 %1966
        %v1968 = vmul.f32 %v1967, %v1610
        %v1969 = vsub.f32 %v1963, %v1968
        %v1970 = vmul.f32 %v1969, %v1969
        %1971 = vadd.xlane.f32.xlu0 %v1970
        %v1972 = vpop.xlane.xlu0 %1971
        %v1973 = vmul.f32 %v1972, %v1610
        %v1974 = vadd.f32 %v1973, 1e-05
        %v1975 = vrsqrt.pop %v1974
        %v1976 = vmul.f32 %v1969, %v1975
        %v1978 = vlaneseq
        %v1979 = vshrl.u32 %v1978, 7
        %v1980 = vsub.s32 0, %v1979
        %v1981 = vrot.slane %v1964, %v1980
        %v1983 = vmul.f32 %v1976, %v1981
        %v1985 = vlaneseq
        %v1986 = vshrl.u32 %v1985, 7
        %v1987 = vsub.s32 0, %v1986
        %v1988 = vrot.slane %v1965, %v1987
        %v1990 = vadd.f32 %v1983, %v1988
        %1991 = vst [vmem:[#allocation2] sm:$0xff] %v1990
        %p1992 = scmp.eq.s32.totalorder %s46, 1
        // Predicated region
        $region109: #{tpu_custom_call.1} parent=67 // pred_check
          %p1993 = pneg %p1992
        $region110: #{tpu_custom_call.1} parent=67 // pred_check_branch
          %1995 = sbr.rel (%p1993) target = $region112
        $region111: #{tpu_custom_call.1} parent=67 // pred_region
          %1996 = vst [vmem:[%s684] sm:$0xff] %v1990
        $region112: #{tpu_custom_call.1} parent=67 // pred_fallthru
          _
        %s1997 = sand.u32 %s373, 1
        %s1998 = scalar_lea.sflag [#allocation7], %s1997
        %s1999 = sand.u32 %s373, 1
        %s2000 = smul.addr %s1999, 8
        %s2001 = scalar_lea.vmem [#allocation13], %s2000
        %s2002 = sand.u32 %s399, 1
        %s2003 = scalar_lea.sflag [#allocation15], %s2002
        %s2004 = sand.u32 %s399, 1
        %s2005 = smul.addr %s2004, 8
        %s2006 = scalar_lea.vmem [#allocation14], %s2005
        // Predicated region
        $region113: #{tpu_custom_call.1} parent=67 // pred_check
          %p2007 = pneg %p383
        $region114: #{tpu_custom_call.1} parent=67 // pred_check_branch
          %2009 = sbr.rel (%p2007) target = $region116
        $region115: #{tpu_custom_call.1} parent=67 // pred_region
          %s2011 = ssub.s32 128, 128
          %2012 = vsyncadd %s1998, %s2011
          %s2013 = smul.addr %s45, 128
          %s2014 = scalar_lea.hbm %s13, %s2013
          %s2016 = sshll.u32 %s2001, 4
          %s2017 = int_to_ptr.vmem [resolvable:$true] %s2016
          %2019 = dma.vmem_to_hbm [thread:$0]  %s2017, 128, %s2014, %s1998
        $region116: #{tpu_custom_call.1} parent=67 // pred_fallthru
          _
        // Predicated region
        $region117: #{tpu_custom_call.1} parent=67 // pred_check
          %p2020 = pneg %p409
        $region118: #{tpu_custom_call.1} parent=67 // pred_check_branch
          %2022 = sbr.rel (%p2020) target = $region120
        $region119: #{tpu_custom_call.1} parent=67 // pred_region
          %s2024 = ssub.s32 128, 128
          %2025 = vsyncadd %s2003, %s2024
          %s2026 = smul.addr %s45, 128
          %s2027 = scalar_lea.hbm %s14, %s2026
          %s2029 = sshll.u32 %s2006, 4
          %s2030 = int_to_ptr.vmem [resolvable:$true] %s2029
          %2032 = dma.vmem_to_hbm [thread:$0]  %s2030, 128, %s2027, %s2003
        $region120: #{tpu_custom_call.1} parent=67 // pred_fallthru
          _
      $region68: #{tpu_custom_call.1} parent=5 // pred_fallthru
        _
      %p2033 = scmp.le.s32.totalorder 2, %s36
      // Predicated region
      $region121: #{tpu_custom_call.1} parent=5 // pred_check
        %p2034 = pneg %p2033
      $region122: #{tpu_custom_call.1} parent=5 // pred_check_branch
        %2036 = sbr.rel (%p2034) target = $region124
      $region123: #{tpu_custom_call.1} parent=5 // pred_region
        %s2037 = ssub.s32 %s36, 2
        // Predicated region
        $region125: #{tpu_custom_call.1} parent=123 // pred_check
          %p2038 = pneg %p389
        $region126: #{tpu_custom_call.1} parent=123 // pred_check_branch
          %2040 = sbr.rel (%p2038) target = $region128
        $region127: #{tpu_custom_call.1} parent=123 // pred_region
          %s2041 = sand.u32 %s374, 1
          %s2042 = scalar_lea.sflag [#allocation7], %s2041
          %s2043 = sand.u32 %s374, 1
          %s2044 = smul.addr %s2043, 8
          %s2045 = scalar_lea.vmem [#allocation13], %s2044
          %2046 = dma.done %s2042, 128
        $region128: #{tpu_custom_call.1} parent=123 // pred_fallthru
          _
        // Predicated region
        $region129: #{tpu_custom_call.1} parent=123 // pred_check
          %p2047 = pneg %p415
        $region130: #{tpu_custom_call.1} parent=123 // pred_check_branch
          %2049 = sbr.rel (%p2047) target = $region132
        $region131: #{tpu_custom_call.1} parent=123 // pred_region
          %s2050 = sand.u32 %s400, 1
          %s2051 = scalar_lea.sflag [#allocation15], %s2050
          %s2052 = sand.u32 %s400, 1
          %s2053 = smul.addr %s2052, 8
          %s2054 = scalar_lea.vmem [#allocation14], %s2053
          %2055 = dma.done %s2051, 128
        $region132: #{tpu_custom_call.1} parent=123 // pred_fallthru
          _
      $region124: #{tpu_custom_call.1} parent=5 // pred_fallthru
        _
    $region6: #{tpu_custom_call.1} parent=1 // loop_footer
      %s40 = sadd.s32 1, %s36
    $region7: #{tpu_custom_call.1} parent=1 // loop_footer_branch
      %35 = sbr.rel target = $region3
    $region8: #{tpu_custom_call.1} parent=1 // loop_exit
      _
    %2056 = vsyncpa [#allocation6], 1
    %s2057 = scalar_lea.sflag [#allocation6], 1
    %2058 = vsyncpa %s2057, 1
    %2059 = vsyncpa [#allocation9], 1
    %s2060 = scalar_lea.sflag [#allocation9], 1
    %2061 = vsyncpa %s2060, 1
    %2062 = vsyncpa [#allocation12], 1
    %s2063 = scalar_lea.sflag [#allocation12], 1
    %2064 = vsyncpa %s2063, 1
    %2065 = vsyncpa [#allocation7], 1
    %s2066 = scalar_lea.sflag [#allocation7], 1
    %2067 = vsyncpa %s2066, 1
    %2068 = vsyncpa [#allocation15], 1
    %s2069 = scalar_lea.sflag [#allocation15], 1
    %2070 = vsyncpa %s2069, 1
  %2071 = vsyncmov [#allocation4]
  %s2072 = vpop.sfrf %2071
  %p2073 = scmp.eq.s32.totalorder %s2072, 0
  %p2074 = pneg %p2073
  %2076 = shalt.err (%p2074)

</llo_original>
